<compile_context>
chip_gen: v6e
topology: v6e:2x2x1
jax: 0.10.0
libtpu: 0.0.40
codegen_flags: <defaults>
</compile_context>

<pallas_src>
import math

import numpy as np
import jax
import jax.numpy as jnp
from jax.experimental import pallas as pl
from jax.experimental.pallas import tpu as pltpu


def _num_tensorcores_per_chip():
    """Best-effort detection: v7x has 2 TensorCores/chip, v5e/v6e have 1."""
    try:
        kind = jax.devices()[0].device_kind.lower()
    except Exception:
        return 1
    return 2 if ("v7" in kind or "7x" in kind) else 1


# ----------------------------------------------------------------------------
# Pallas kernel + wrapper
# ----------------------------------------------------------------------------
def local_context_attention(target_nchw, source_nchw, params, kernel_size,
                            num_blocks=None):
    """Forward pass of LocalContextAttentionBlock.

    target_nchw, source_nchw: (B, C_in, H, W) float32 (PyTorch NCHW convention)
    params: dict of folded conv weights/biases (see make_params)
    returns: (B, C_out, H, W) float32
    """
    B, Cin, H, W = target_nchw.shape
    Cout = params["wq2"].shape[1]
    ks = kernel_size
    pad = ks // 2
    # Guard the flat-offset + edge-mask scheme (window must fit in the image).
    assert pad < H and pad < W, "kernel_size too large for the spatial extent"
    HW = H * W
    K2 = ks * ks
    scale = 1.0 / math.sqrt(Cout)

    # One lane block per TensorCore (whole images per block -> no halo needed,
    # the edge masks already zero every cross-image contribution).
    if num_blocks is None:
        num_blocks = math.gcd(B, _num_tensorcores_per_chip())
    num_blocks = max(1, num_blocks)
    assert B % num_blocks == 0
    Bb = B // num_blocks          # images per grid step
    Lb = Bb * HW                  # lanes per grid step (multiple of 128)
    L = B * HW

    # Channel-major, batch-folded-into-lanes layout: (C, B*H*W), lane-dense.
    def to_cl(x):                 # (B, C, H, W) -> (C, B*HW)
        c = x.shape[1]
        return x.reshape(B, c, HW).transpose(1, 0, 2).reshape(c, L)

    x_cat = jnp.concatenate([to_cl(target_nchw), to_cl(source_nchw)], axis=0)  # (2*Cin, L)

    # --- Fold the five 1x1 ConvBNReLU projections into two fused matmuls. ---
    z_oc = jnp.zeros((Cout, Cin), jnp.float32)
    W1 = jnp.concatenate([                                   # (3*Cout, 2*Cin)
        jnp.concatenate([params["wq1"].T, z_oc], axis=1),    # q1 <- target
        jnp.concatenate([z_oc, params["wk1"].T], axis=1),    # k1 <- source
        jnp.concatenate([z_oc, params["wv"].T], axis=1),     # v  <- source
    ], axis=0)
    b1 = jnp.concatenate([params["bq1"], params["bk1"], params["bv"]], axis=1).T  # (3*Cout, 1)

    z_oo = jnp.zeros((Cout, Cout), jnp.float32)
    # 1/sqrt(Cout) similarity scale folded into the q branch (ReLU commutes
    # with a positive scale).
    W2 = jnp.concatenate([                                   # (2*Cout, 2*Cout)
        jnp.concatenate([params["wq2"].T * scale, z_oo], axis=1),
        jnp.concatenate([z_oo, params["wk2"].T], axis=1),
    ], axis=0)
    b2 = jnp.concatenate([params["bq2"] * scale, params["bk2"]], axis=1).T       # (2*Cout, 1)

    # --- Static window offsets + edge-validity masks, built at trace time. ---
    hh, ww = np.meshgrid(np.arange(H), np.arange(W), indexing="ij")
    offsets, mask_rows = [], []
    for di in range(ks):
        for dj in range(ks):
            dh, dw = di - pad, dj - pad
            offsets.append(dh * W + dw)
            valid = ((hh + dh >= 0) & (hh + dh < H) &
                     (ww + dw >= 0) & (ww + dw < W))
            mask_rows.append(valid.reshape(-1))
    masks_np = np.stack(mask_rows, axis=0).astype(np.float32)       # (K2, HW)
    masks = jnp.asarray(np.tile(masks_np, (1, Bb)))                 # (K2, Lb) per block

    def kernel(x_ref, w1_ref, b1_ref, w2_ref, b2_ref, msk_ref, out_ref):
        x = x_ref[...]                                              # (2*Cin, Lb)

        # Stage-1 fused projection: [q1; k1; v] in one MXU matmul.
        y1 = jnp.dot(w1_ref[...], x, preferred_element_type=jnp.float32) + b1_ref[...]
        y1 = jnp.maximum(y1, 0.0)                                   # (3*Cout, Lb)

        # Stage-2 fused projection: [q (pre-scaled); k] in one MXU matmul.
        y2 = jnp.dot(w2_ref[...], y1[:2 * Cout],
                     preferred_element_type=jnp.float32) + b2_ref[...]
        y2 = jnp.maximum(y2, 0.0)                                   # (2*Cout, Lb)

        q = y2[:Cout]
        k = y2[Cout:]
        v = y1[2 * Cout:]
        msk = msk_ref[...]                                          # (K2, Lb)

        # Pass 1: local-window logits. out[:, p] uses source position p + s;
        # the XLU lane rotation wraps, and the precomputed edge mask zeroes
        # every wrapped / out-of-image position (emulating zero padding).
        sims = []
        for s in offsets:
            k_s = k if s == 0 else pltpu.roll(k, (-s) % Lb, 1)
            sims.append(jnp.sum(q * k_s, axis=0, keepdims=True))    # (1, Lb)
        logits = jnp.concatenate(sims, axis=0) * msk                # (K2, Lb)

        # Softmax over the offset (sublane) axis; exp computed exactly once.
        m = jnp.max(logits, axis=0, keepdims=True)                  # (1, Lb)
        e = jnp.exp(logits - m)                                     # (K2, Lb)
        # Exact divide: the approx EUP reciprocal missed the 1e-3 tolerance.
        inv = 1.0 / jnp.sum(e, axis=0, keepdims=True)               # (1, Lb)
        ew = e * msk                                                # mask wrapped values

        # Pass 2: weighted value aggregation, normalized once at the end.
        acc = jnp.zeros((Cout, Lb), jnp.float32)
        for idx, s in enumerate(offsets):
            v_s = v if s == 0 else pltpu.roll(v, (-s) % Lb, 1)
            acc = acc + ew[idx:idx + 1] * v_s
        out_ref[...] = (acc * inv).astype(out_ref.dtype)

    const = lambda shape: pl.BlockSpec(shape, lambda i: (0, 0))

    out_flat = pl.pallas_call(
        kernel,
        out_shape=jax.ShapeDtypeStruct((Cout, L), jnp.float32),
        grid=(num_blocks,),
        in_specs=[
            pl.BlockSpec((2 * Cin, Lb), lambda i: (0, i)),   # activations
            const(W1.shape), const(b1.shape),                # fused stage-1 weights
            const(W2.shape), const(b2.shape),                # fused stage-2 weights
            const(masks.shape),                              # edge-validity masks
        ],
        out_specs=pl.BlockSpec((Cout, Lb), lambda i: (0, i)),
        compiler_params=pltpu.CompilerParams(
            dimension_semantics=("parallel",)),              # per-image blocks -> v7x TCs
    )(x_cat, W1, b1, W2, b2, masks)

    # (Cout, B*HW) -> (B, Cout, H, W)
    return out_flat.reshape(Cout, B, H, W).transpose(1, 0, 2, 3)


# ----------------------------------------------------------------------------
# Deterministic parameter construction (xavier-uniform conv weights, bias=0,
# eval-mode BatchNorm folded into the conv).
# ----------------------------------------------------------------------------
def make_params(key, c_in, c_out):
    bn_scale = 1.0 / math.sqrt(1.0 + 1e-5)  # gamma=1, var=1, eps=1e-5, mean=0, beta=0

    def xavier(key, fan_in, fan_out):
        a = math.sqrt(6.0 / (fan_in + fan_out))
        return jax.random.uniform(key, (fan_in, fan_out), jnp.float32, -a, a)

    keys = jax.random.split(key, 5)
    return {
        "wq1": xavier(keys[0], c_in, c_out) * bn_scale,
        "bq1": jnp.zeros((1, c_out), jnp.float32),
        "wq2": xavier(keys[1], c_out, c_out) * bn_scale,
        "bq2": jnp.zeros((1, c_out), jnp.float32),
        "wk1": xavier(keys[2], c_in, c_out) * bn_scale,
        "bk1": jnp.zeros((1, c_out), jnp.float32),
        "wk2": xavier(keys[3], c_out, c_out) * bn_scale,
        "bk2": jnp.zeros((1, c_out), jnp.float32),
        "wv":  xavier(keys[4], c_in, c_out) * bn_scale,
        "bv":  jnp.zeros((1, c_out), jnp.float32),
    }


# ----------------------------------------------------------------------------
# Pure-JAX reference (for a correctness check)
# ----------------------------------------------------------------------------
def reference_forward(target, source, params, ks):
    def conv_relu(x, w, b):  # x: (B, C, H, W); w: (Cin, Cout); b: (1, Cout)
        y = jnp.einsum("bchw,co->bohw", x, w) + b[0][None, :, None, None]
        return jnp.maximum(y, 0.0)

    q = conv_relu(conv_relu(target, params["wq1"], params["bq1"]),
                  params["wq2"], params["bq2"])
    k = conv_relu(conv_relu(source, params["wk1"], params["bk1"]),
                  params["wk2"], params["bk2"])
    v = conv_relu(source, params["wv"], params["bv"])

    B, C, H, W = q.shape
    pad = ks // 2
    kp = jnp.pad(k, ((0, 0), (0, 0), (pad, pad), (pad, pad)))
    vp = jnp.pad(v, ((0, 0), (0, 0), (pad, pad), (pad, pad)))

    sims = []
    for di in range(ks):
        for dj in range(ks):
            sims.append(jnp.sum(q * kp[:, :, di:di + H, dj:dj + W], axis=1))  # (B,H,W)
    weight = jnp.stack(sims, axis=-1)                                          # (B,H,W,K)
    weight = jax.nn.softmax(weight / math.sqrt(C), axis=-1)

    out = jnp.zeros_like(q)
    idx = 0
    for di in range(ks):
        for dj in range(ks):
            out = out + weight[..., idx][:, None, :, :] * vp[:, :, di:di + H, dj:dj + W]
            idx += 1
    return out


# ----------------------------------------------------------------------------
if __name__ == "__main__":
    B, C_IN, C_OUT, H, W = 2, 4, 8, 16, 16
    KERNEL_SIZE = 3

    root = jax.random.PRNGKey(0)
    k_param, k_tgt, k_src = jax.random.split(root, 3)

    params = make_params(k_param, C_IN, C_OUT)
    target = jax.random.normal(k_tgt, (B, C_IN, H, W), jnp.float32)
    source = jax.random.normal(k_src, (B, C_IN, H, W), jnp.float32)

    out = local_context_attention(target, source, params, KERNEL_SIZE)
    out = jax.block_until_ready(out)

    ref = jax.block_until_ready(reference_forward(target, source, params, KERNEL_SIZE))
    assert out.shape == (B, C_OUT, H, W), out.shape
    err = float(jnp.max(jnp.abs(out - ref)))
    assert jnp.allclose(out, ref, atol=1e-3, rtol=1e-3), err

    print("KERNEL_OK")
</pallas_src>

<mosaic_0001>
module attributes {stable_mosaic.version = 11 : i64} {
  func.func @kernel(%arg0: i32, %arg1: memref<8x512xf32, #tpu.memory_space<vmem>>, %arg2: memref<24x8xf32, #tpu.memory_space<vmem>>, %arg3: memref<24x1xf32, #tpu.memory_space<vmem>>, %arg4: memref<16x16xf32, #tpu.memory_space<vmem>>, %arg5: memref<16x1xf32, #tpu.memory_space<vmem>>, %arg6: memref<9x512xf32, #tpu.memory_space<vmem>>, %arg7: memref<8x512xf32, #tpu.memory_space<vmem>>) attributes {dimension_semantics = [#tpu.dimension_semantics<parallel>], iteration_bounds = array<i64: 1>, scalar_prefetch = 0 : i64, scratch_operands = 0 : i64, tpu.core_type = #tpu.core_type<tc>, window_params = [{transform_indices = @transform_0, window_bounds = array<i64: 8, 512>}, {pipeline_mode = #tpu.pipeline_mode<synchronous>, transform_indices = @transform_1, window_bounds = array<i64: 24, 8>}, {pipeline_mode = #tpu.pipeline_mode<synchronous>, transform_indices = @transform_2, window_bounds = array<i64: 24, 1>}, {pipeline_mode = #tpu.pipeline_mode<synchronous>, transform_indices = @transform_3, window_bounds = array<i64: 16, 16>}, {pipeline_mode = #tpu.pipeline_mode<synchronous>, transform_indices = @transform_4, window_bounds = array<i64: 16, 1>}, {pipeline_mode = #tpu.pipeline_mode<synchronous>, transform_indices = @transform_5, window_bounds = array<i64: 9, 512>}, {transform_indices = @transform_6, window_bounds = array<i64: 8, 512>}]} {
    %c0 = arith.constant 0 : index
    %c0_0 = arith.constant 0 : index
    %0 = vector.load %arg1[%c0, %c0_0] : memref<8x512xf32, #tpu.memory_space<vmem>>, vector<8x512xf32>
    %c0_1 = arith.constant 0 : index
    %c0_2 = arith.constant 0 : index
    %1 = vector.load %arg2[%c0_1, %c0_2] : memref<24x8xf32, #tpu.memory_space<vmem>>, vector<24x8xf32>
    %cst = arith.constant dense<0.000000e+00> : vector<24x512xf32>
    %2 = tpu.matmul %1, %0, %cst {dimension_numbers = #tpu.dot_dimension_numbers<[1], [0], [0], [1], [0, 0, 1, 1], [], []>} : vector<24x8xf32>, vector<8x512xf32>, vector<24x512xf32> -> vector<24x512xf32>
    %c0_3 = arith.constant 0 : index
    %c0_4 = arith.constant 0 : index
    %3 = vector.load %arg3[%c0_3, %c0_4] : memref<24x1xf32, #tpu.memory_space<vmem>>, vector<24x1xf32>
    %4 = vector.broadcast %3 : vector<24x1xf32> to vector<24x512xf32>
    %5 = arith.addf %2, %4 : vector<24x512xf32>
    %cst_5 = arith.constant 0.000000e+00 : f32
    %6 = vector.broadcast %cst_5 : f32 to vector<24x512xf32>
    %7 = arith.maximumf %5, %6 : vector<24x512xf32>
    %c0_6 = arith.constant 0 : index
    %c0_7 = arith.constant 0 : index
    %8 = vector.load %arg4[%c0_6, %c0_7] : memref<16x16xf32, #tpu.memory_space<vmem>>, vector<16x16xf32>
    %9 = vector.extract_strided_slice %7 {offsets = [0, 0], sizes = [16, 512], strides = [1, 1]} : vector<24x512xf32> to vector<16x512xf32>
    %cst_8 = arith.constant dense<0.000000e+00> : vector<16x512xf32>
    %10 = tpu.matmul %8, %9, %cst_8 {dimension_numbers = #tpu.dot_dimension_numbers<[1], [0], [0], [1], [0, 0, 1, 1], [], []>} : vector<16x16xf32>, vector<16x512xf32>, vector<16x512xf32> -> vector<16x512xf32>
    %c0_9 = arith.constant 0 : index
    %c0_10 = arith.constant 0 : index
    %11 = vector.load %arg5[%c0_9, %c0_10] : memref<16x1xf32, #tpu.memory_space<vmem>>, vector<16x1xf32>
    %12 = vector.broadcast %11 : vector<16x1xf32> to vector<16x512xf32>
    %13 = arith.addf %10, %12 : vector<16x512xf32>
    %cst_11 = arith.constant 0.000000e+00 : f32
    %14 = vector.broadcast %cst_11 : f32 to vector<16x512xf32>
    %15 = arith.maximumf %13, %14 : vector<16x512xf32>
    %16 = vector.extract_strided_slice %15 {offsets = [0, 0], sizes = [8, 512], strides = [1, 1]} : vector<16x512xf32> to vector<8x512xf32>
    %17 = vector.extract_strided_slice %15 {offsets = [8, 0], sizes = [8, 512], strides = [1, 1]} : vector<16x512xf32> to vector<8x512xf32>
    %18 = vector.extract_strided_slice %7 {offsets = [16, 0], sizes = [8, 512], strides = [1, 1]} : vector<24x512xf32> to vector<8x512xf32>
    %c0_12 = arith.constant 0 : index
    %c0_13 = arith.constant 0 : index
    %19 = vector.load %arg6[%c0_12, %c0_13] : memref<9x512xf32, #tpu.memory_space<vmem>>, vector<9x512xf32>
    %c17_i32 = arith.constant 17 : i32
    %20 = tpu.dynamic_rotate %17 by %c17_i32 dim 1 : vector<8x512xf32>, i32 -> vector<8x512xf32>
    %21 = arith.mulf %16, %20 : vector<8x512xf32>
    %cst_14 = arith.constant dense<0.000000e+00> : vector<512xf32>
    %22 = vector.multi_reduction <add>, %21, %cst_14 [0] : vector<8x512xf32> to vector<512xf32>
    %23 = vector.shape_cast %22 : vector<512xf32> to vector<1x512xf32>
    %c16_i32 = arith.constant 16 : i32
    %24 = tpu.dynamic_rotate %17 by %c16_i32 dim 1 : vector<8x512xf32>, i32 -> vector<8x512xf32>
    %25 = arith.mulf %16, %24 : vector<8x512xf32>
    %cst_15 = arith.constant dense<0.000000e+00> : vector<512xf32>
    %26 = vector.multi_reduction <add>, %25, %cst_15 [0] : vector<8x512xf32> to vector<512xf32>
    %27 = vector.shape_cast %26 : vector<512xf32> to vector<1x512xf32>
    %c15_i32 = arith.constant 15 : i32
    %28 = tpu.dynamic_rotate %17 by %c15_i32 dim 1 : vector<8x512xf32>, i32 -> vector<8x512xf32>
    %29 = arith.mulf %16, %28 : vector<8x512xf32>
    %cst_16 = arith.constant dense<0.000000e+00> : vector<512xf32>
    %30 = vector.multi_reduction <add>, %29, %cst_16 [0] : vector<8x512xf32> to vector<512xf32>
    %31 = vector.shape_cast %30 : vector<512xf32> to vector<1x512xf32>
    %c1_i32 = arith.constant 1 : i32
    %32 = tpu.dynamic_rotate %17 by %c1_i32 dim 1 : vector<8x512xf32>, i32 -> vector<8x512xf32>
    %33 = arith.mulf %16, %32 : vector<8x512xf32>
    %cst_17 = arith.constant dense<0.000000e+00> : vector<512xf32>
    %34 = vector.multi_reduction <add>, %33, %cst_17 [0] : vector<8x512xf32> to vector<512xf32>
    %35 = vector.shape_cast %34 : vector<512xf32> to vector<1x512xf32>
    %36 = arith.mulf %16, %17 : vector<8x512xf32>
    %cst_18 = arith.constant dense<0.000000e+00> : vector<512xf32>
    %37 = vector.multi_reduction <add>, %36, %cst_18 [0] : vector<8x512xf32> to vector<512xf32>
    %38 = vector.shape_cast %37 : vector<512xf32> to vector<1x512xf32>
    %c511_i32 = arith.constant 511 : i32
    %39 = tpu.dynamic_rotate %17 by %c511_i32 dim 1 : vector<8x512xf32>, i32 -> vector<8x512xf32>
    %40 = arith.mulf %16, %39 : vector<8x512xf32>
    %cst_19 = arith.constant dense<0.000000e+00> : vector<512xf32>
    %41 = vector.multi_reduction <add>, %40, %cst_19 [0] : vector<8x512xf32> to vector<512xf32>
    %42 = vector.shape_cast %41 : vector<512xf32> to vector<1x512xf32>
    %c497_i32 = arith.constant 497 : i32
    %43 = tpu.dynamic_rotate %17 by %c497_i32 dim 1 : vector<8x512xf32>, i32 -> vector<8x512xf32>
    %44 = arith.mulf %16, %43 : vector<8x512xf32>
    %cst_20 = arith.constant dense<0.000000e+00> : vector<512xf32>
    %45 = vector.multi_reduction <add>, %44, %cst_20 [0] : vector<8x512xf32> to vector<512xf32>
    %46 = vector.shape_cast %45 : vector<512xf32> to vector<1x512xf32>
    %c496_i32 = arith.constant 496 : i32
    %47 = tpu.dynamic_rotate %17 by %c496_i32 dim 1 : vector<8x512xf32>, i32 -> vector<8x512xf32>
    %48 = arith.mulf %16, %47 : vector<8x512xf32>
    %cst_21 = arith.constant dense<0.000000e+00> : vector<512xf32>
    %49 = vector.multi_reduction <add>, %48, %cst_21 [0] : vector<8x512xf32> to vector<512xf32>
    %50 = vector.shape_cast %49 : vector<512xf32> to vector<1x512xf32>
    %c495_i32 = arith.constant 495 : i32
    %51 = tpu.dynamic_rotate %17 by %c495_i32 dim 1 : vector<8x512xf32>, i32 -> vector<8x512xf32>
    %52 = arith.mulf %16, %51 : vector<8x512xf32>
    %cst_22 = arith.constant dense<0.000000e+00> : vector<512xf32>
    %53 = vector.multi_reduction <add>, %52, %cst_22 [0] : vector<8x512xf32> to vector<512xf32>
    %54 = vector.shape_cast %53 : vector<512xf32> to vector<1x512xf32>
    %55 = tpu.concatenate %23, %27, %31, %35, %38, %42, %46, %50, %54 in 0 : vector<1x512xf32>, vector<1x512xf32>, vector<1x512xf32>, vector<1x512xf32>, vector<1x512xf32>, vector<1x512xf32>, vector<1x512xf32>, vector<1x512xf32>, vector<1x512xf32> -> vector<9x512xf32>
    %56 = arith.mulf %55, %19 : vector<9x512xf32>
    %cst_23 = arith.constant dense<0xFF800000> : vector<512xf32>
    %57 = vector.multi_reduction <maximumf>, %56, %cst_23 [0] : vector<9x512xf32> to vector<512xf32>
    %58 = vector.shape_cast %57 : vector<512xf32> to vector<1x512xf32>
    %59 = vector.broadcast %58 : vector<1x512xf32> to vector<9x512xf32>
    %60 = arith.subf %56, %59 : vector<9x512xf32>
    %61 = math.exp %60 : vector<9x512xf32>
    %cst_24 = arith.constant dense<0.000000e+00> : vector<512xf32>
    %62 = vector.multi_reduction <add>, %61, %cst_24 [0] : vector<9x512xf32> to vector<512xf32>
    %63 = vector.shape_cast %62 : vector<512xf32> to vector<1x512xf32>
    %cst_25 = arith.constant 1.000000e+00 : f32
    %64 = vector.broadcast %cst_25 : f32 to vector<1x512xf32>
    %65 = arith.divf %64, %63 : vector<1x512xf32>
    %66 = arith.mulf %61, %19 : vector<9x512xf32>
    %cst_26 = arith.constant 0.000000e+00 : f32
    %67 = vector.broadcast %cst_26 : f32 to vector<8x512xf32>
    %c17_i32_27 = arith.constant 17 : i32
    %68 = tpu.dynamic_rotate %18 by %c17_i32_27 dim 1 : vector<8x512xf32>, i32 -> vector<8x512xf32>
    %69 = vector.extract_strided_slice %66 {offsets = [0, 0], sizes = [1, 512], strides = [1, 1]} : vector<9x512xf32> to vector<1x512xf32>
    %70 = vector.broadcast %69 : vector<1x512xf32> to vector<8x512xf32>
    %71 = arith.mulf %70, %68 : vector<8x512xf32>
    %72 = arith.addf %67, %71 : vector<8x512xf32>
    %c16_i32_28 = arith.constant 16 : i32
    %73 = tpu.dynamic_rotate %18 by %c16_i32_28 dim 1 : vector<8x512xf32>, i32 -> vector<8x512xf32>
    %74 = vector.extract_strided_slice %66 {offsets = [1, 0], sizes = [1, 512], strides = [1, 1]} : vector<9x512xf32> to vector<1x512xf32>
    %75 = vector.broadcast %74 : vector<1x512xf32> to vector<8x512xf32>
    %76 = arith.mulf %75, %73 : vector<8x512xf32>
    %77 = arith.addf %72, %76 : vector<8x512xf32>
    %c15_i32_29 = arith.constant 15 : i32
    %78 = tpu.dynamic_rotate %18 by %c15_i32_29 dim 1 : vector<8x512xf32>, i32 -> vector<8x512xf32>
    %79 = vector.extract_strided_slice %66 {offsets = [2, 0], sizes = [1, 512], strides = [1, 1]} : vector<9x512xf32> to vector<1x512xf32>
    %80 = vector.broadcast %79 : vector<1x512xf32> to vector<8x512xf32>
    %81 = arith.mulf %80, %78 : vector<8x512xf32>
    %82 = arith.addf %77, %81 : vector<8x512xf32>
    %c1_i32_30 = arith.constant 1 : i32
    %83 = tpu.dynamic_rotate %18 by %c1_i32_30 dim 1 : vector<8x512xf32>, i32 -> vector<8x512xf32>
    %84 = vector.extract_strided_slice %66 {offsets = [3, 0], sizes = [1, 512], strides = [1, 1]} : vector<9x512xf32> to vector<1x512xf32>
    %85 = vector.broadcast %84 : vector<1x512xf32> to vector<8x512xf32>
    %86 = arith.mulf %85, %83 : vector<8x512xf32>
    %87 = arith.addf %82, %86 : vector<8x512xf32>
    %88 = vector.extract_strided_slice %66 {offsets = [4, 0], sizes = [1, 512], strides = [1, 1]} : vector<9x512xf32> to vector<1x512xf32>
    %89 = vector.broadcast %88 : vector<1x512xf32> to vector<8x512xf32>
    %90 = arith.mulf %89, %18 : vector<8x512xf32>
    %91 = arith.addf %87, %90 : vector<8x512xf32>
    %c511_i32_31 = arith.constant 511 : i32
    %92 = tpu.dynamic_rotate %18 by %c511_i32_31 dim 1 : vector<8x512xf32>, i32 -> vector<8x512xf32>
    %93 = vector.extract_strided_slice %66 {offsets = [5, 0], sizes = [1, 512], strides = [1, 1]} : vector<9x512xf32> to vector<1x512xf32>
    %94 = vector.broadcast %93 : vector<1x512xf32> to vector<8x512xf32>
    %95 = arith.mulf %94, %92 : vector<8x512xf32>
    %96 = arith.addf %91, %95 : vector<8x512xf32>
    %c497_i32_32 = arith.constant 497 : i32
    %97 = tpu.dynamic_rotate %18 by %c497_i32_32 dim 1 : vector<8x512xf32>, i32 -> vector<8x512xf32>
    %98 = vector.extract_strided_slice %66 {offsets = [6, 0], sizes = [1, 512], strides = [1, 1]} : vector<9x512xf32> to vector<1x512xf32>
    %99 = vector.broadcast %98 : vector<1x512xf32> to vector<8x512xf32>
    %100 = arith.mulf %99, %97 : vector<8x512xf32>
    %101 = arith.addf %96, %100 : vector<8x512xf32>
    %c496_i32_33 = arith.constant 496 : i32
    %102 = tpu.dynamic_rotate %18 by %c496_i32_33 dim 1 : vector<8x512xf32>, i32 -> vector<8x512xf32>
    %103 = vector.extract_strided_slice %66 {offsets = [7, 0], sizes = [1, 512], strides = [1, 1]} : vector<9x512xf32> to vector<1x512xf32>
    %104 = vector.broadcast %103 : vector<1x512xf32> to vector<8x512xf32>
    %105 = arith.mulf %104, %102 : vector<8x512xf32>
    %106 = arith.addf %101, %105 : vector<8x512xf32>
    %c495_i32_34 = arith.constant 495 : i32
    %107 = tpu.dynamic_rotate %18 by %c495_i32_34 dim 1 : vector<8x512xf32>, i32 -> vector<8x512xf32>
    %108 = vector.extract_strided_slice %66 {offsets = [8, 0], sizes = [1, 512], strides = [1, 1]} : vector<9x512xf32> to vector<1x512xf32>
    %109 = vector.broadcast %108 : vector<1x512xf32> to vector<8x512xf32>
    %110 = arith.mulf %109, %107 : vector<8x512xf32>
    %111 = arith.addf %106, %110 : vector<8x512xf32>
    %112 = vector.broadcast %65 : vector<1x512xf32> to vector<8x512xf32>
    %113 = arith.mulf %111, %112 : vector<8x512xf32>
    %c0_35 = arith.constant 0 : index
    %c0_36 = arith.constant 0 : index
    %114 = vector.load %arg7[%c0_35, %c0_36] : memref<8x512xf32, #tpu.memory_space<vmem>>, vector<8x512xf32>
    tpu.vector_store %arg7[%c0_35, %c0_36], %113 {strides = array<i32>} : memref<8x512xf32, #tpu.memory_space<vmem>>, vector<8x512xf32>,
    return
  }
  func.func @transform_0(%arg0: i32) -> (i32, i32) {
    %c0_i32 = arith.constant 0 : i32
    %c0_i32_0 = arith.constant 0 : i32
    return %c0_i32, %arg0 : i32, i32
  }
  func.func @transform_1(%arg0: i32) -> (i32, i32) {
    %c0_i32 = arith.constant 0 : i32
    %c0_i32_0 = arith.constant 0 : i32
    %c0_i32_1 = arith.constant 0 : i32
    return %c0_i32, %c0_i32_0 : i32, i32
  }
  func.func @transform_2(%arg0: i32) -> (i32, i32) {
    %c0_i32 = arith.constant 0 : i32
    %c0_i32_0 = arith.constant 0 : i32
    %c0_i32_1 = arith.constant 0 : i32
    return %c0_i32, %c0_i32_0 : i32, i32
  }
  func.func @transform_3(%arg0: i32) -> (i32, i32) {
    %c0_i32 = arith.constant 0 : i32
    %c0_i32_0 = arith.constant 0 : i32
    %c0_i32_1 = arith.constant 0 : i32
    return %c0_i32, %c0_i32_0 : i32, i32
  }
  func.func @transform_4(%arg0: i32) -> (i32, i32) {
    %c0_i32 = arith.constant 0 : i32
    %c0_i32_0 = arith.constant 0 : i32
    %c0_i32_1 = arith.constant 0 : i32
    return %c0_i32, %c0_i32_0 : i32, i32
  }
  func.func @transform_5(%arg0: i32) -> (i32, i32) {
    %c0_i32 = arith.constant 0 : i32
    %c0_i32_0 = arith.constant 0 : i32
    %c0_i32_1 = arith.constant 0 : i32
    return %c0_i32, %c0_i32_0 : i32, i32
  }
  func.func @transform_6(%arg0: i32) -> (i32, i32) {
    %c0_i32 = arith.constant 0 : i32
    %c0_i32_0 = arith.constant 0 : i32
    return %c0_i32, %arg0 : i32, i32
  }
}

</mosaic_0001>

<llo_original>
// kernel: tpu_custom_call.1
$region0: #{tpu_custom_call.1}
  #allocation0 [shape = 'u32[]', space=smem, size = 0x4, offset = 0x4, fixed_abs, tag = 'smem constant byte address 0x4 - core index']
  #allocation1 [shape = 'u32[144,128]{1,0:T(1,128)}', space=vmem, size = 0x12000, scoped, tag = 'internal scratch']
  %s0 = inlined_call_operand.hbm [shape: f32[8,512], index: 0, kind: input, shape index: {}]
  %s1 = inlined_call_operand.vmem [shape: f32[24,8], index: 1, kind: input, shape index: {}]
  %s2 = inlined_call_operand.vmem [shape: f32[24,1], index: 2, kind: input, shape index: {}]
  %s3 = inlined_call_operand.vmem [shape: f32[16,16], index: 3, kind: input, shape index: {}]
  %s4 = inlined_call_operand.vmem [shape: f32[16,1], index: 4, kind: input, shape index: {}]
  %s5 = inlined_call_operand.vmem [shape: f32[9,512], index: 5, kind: input, shape index: {}]
  %s6 = inlined_call_operand.hbm [shape: f32[8,512], index: 6, kind: output, shape index: {}]
  %s7 = sld [smem:[#allocation0]]
  $region38: #{tpu_custom_call.1} parent=0
    _
  %s9 = ssub.s32 1, %s7
  %s10 = scalar_select 0, %s9, %s7
  $region1: #{tpu_custom_call.1} parent=0
    #allocation2 [shape = 'u8[16384]{0}', space=vmem, size = 0x4000, scoped, tag = 'input window, operand 0, single buffered']
    #allocation3 [shape = 's32[1]{0}', space=sflag, size = 0x4, scoped, tag = 'scoped memory for tpu_custom_call.1']
    #allocation4 [shape = 's32[1]{0}', space=sflag, size = 0x4, scoped, tag = 'scoped memory for tpu_custom_call.1']
    #allocation5 [shape = 'u8[16384]{0}', space=vmem, size = 0x4000, scoped, tag = 'output window, operand 0, single buffered']
    %11 = vsyncpa [#allocation3], 0
    %12 = vsyncpa [#allocation4], 0
    // Predicated region
    $region2: #{tpu_custom_call.1} parent=1 // pred_check
      _
    $region3: #{tpu_custom_call.1} parent=1 // pred_check_branch
      %14 = sbr.rel (0) target = $region5
    $region4: #{tpu_custom_call.1} parent=1 // pred_region
      %s16 = ssub.s32 512, 512
      %17 = vsyncadd [#allocation3], %s16
      %s19 = sshll.u32 [#allocation2], 4
      %s20 = int_to_ptr.vmem [resolvable:$true] %s19
      %22 = dma.hbm_to_vmem [thread:$0]  %s0, 512, %s20, [#allocation3]
    $region5: #{tpu_custom_call.1} parent=1 // pred_fallthru
      _
    // Predicated region
    $region6: #{tpu_custom_call.1} parent=1 // pred_check
      _
    $region7: #{tpu_custom_call.1} parent=1 // pred_check_branch
      %24 = sbr.rel (0) target = $region9
    $region8: #{tpu_custom_call.1} parent=1 // pred_region
      _
    $region9: #{tpu_custom_call.1} parent=1 // pred_fallthru
      _
    // Predicated region
    $region10: #{tpu_custom_call.1} parent=1 // pred_check
      _
    $region11: #{tpu_custom_call.1} parent=1 // pred_check_branch
      %26 = sbr.rel (0) target = $region13
    $region12: #{tpu_custom_call.1} parent=1 // pred_region
      _
    $region13: #{tpu_custom_call.1} parent=1 // pred_fallthru
      _
    // Predicated region
    $region14: #{tpu_custom_call.1} parent=1 // pred_check
      _
    $region15: #{tpu_custom_call.1} parent=1 // pred_check_branch
      %28 = sbr.rel (0) target = $region17
    $region16: #{tpu_custom_call.1} parent=1 // pred_region
      _
    $region17: #{tpu_custom_call.1} parent=1 // pred_fallthru
      _
    // Predicated region
    $region18: #{tpu_custom_call.1} parent=1 // pred_check
      _
    $region19: #{tpu_custom_call.1} parent=1 // pred_check_branch
      %30 = sbr.rel (0) target = $region21
    $region20: #{tpu_custom_call.1} parent=1 // pred_region
      _
    $region21: #{tpu_custom_call.1} parent=1 // pred_fallthru
      _
    // Predicated region
    $region22: #{tpu_custom_call.1} parent=1 // pred_check
      _
    $region23: #{tpu_custom_call.1} parent=1 // pred_check_branch
      %32 = sbr.rel (0) target = $region25
    $region24: #{tpu_custom_call.1} parent=1 // pred_region
      _
    $region25: #{tpu_custom_call.1} parent=1 // pred_fallthru
      _
    // Predicated region
    $region26: #{tpu_custom_call.1} parent=1 // pred_check
      _
    $region27: #{tpu_custom_call.1} parent=1 // pred_check_branch
      %34 = sbr.rel (0) target = $region29
    $region28: #{tpu_custom_call.1} parent=1 // pred_region
      %35 = dma.done [#allocation3], 512
    $region29: #{tpu_custom_call.1} parent=1 // pred_fallthru
      _
    %v36 = vld [vmem:[#allocation2] sm:$0xff]
    %v37 = vld [vmem:[#allocation2 + $0x8] sm:$0xff]
    %v38 = vld [vmem:[#allocation2 + $0x10] sm:$0xff]
    %v39 = vld [vmem:[#allocation2 + $0x18] sm:$0xff]
    %v40 = vld [vmem:[%s1] sm:$0xff]
    %v41 = vld [vmem:[%s1 + $0x8] sm:$0xff]
    %v42 = vld [vmem:[%s1 + $0x10] sm:$0xff]
    %v43 = vld [vmem:[%s2] sm:$0xff]
    %v44 = vld [vmem:[%s2 + $0x8] sm:$0xff]
    %v45 = vld [vmem:[%s2 + $0x10] sm:$0xff]
    %47 = vset.pattern.permute.xlu0 0
    %48 = vperm.xlu0 %47, %v43
    %v49 = vpop.permute.xlu0 %48
    %52 = vset.pattern.permute.xlu0 0
    %53 = vperm.xlu0 %52, %v44
    %v54 = vpop.permute.xlu0 %53
    %57 = vset.pattern.permute.xlu0 0
    %58 = vperm.xlu0 %57, %v45
    %v59 = vpop.permute.xlu0 %58
    %vm61 = vcmask 64512
    %v63 = vsel %vm61, %v40, 0
    %v66 = vsel %vm61, %v41, 0
    %v69 = vsel %vm61, %v42, 0
    %71 = vmatprep.subr.mxu0 0.0
    %72 = vmatpush1.msra.mxu0 0.0
    %73 = vmatprep.subr.mxu0 0.0
    %74 = vmatpush1.msra.mxu0 0.0
    %75 = vmatprep.subr.mxu0 0.0
    %76 = vmatpush1.msra.mxu0 0.0
    %77 = vmatprep.subr.mxu0 0.0
    %78 = vmatpush1.msra.mxu0 0.0
    %79 = vmatprep.subr.mxu0 0.0
    %80 = vmatpush1.msra.mxu0 0.0
    %81 = vmatprep.subr.mxu0 0.0
    %82 = vmatpush1.msra.mxu0 0.0
    %83 = vmatprep.subr.mxu0 0.0
    %84 = vmatpush1.msra.mxu0 0.0
    %85 = vmatprep.subr.mxu0 0.0
    %86 = vmatpush1.msra.mxu0 0.0
    %87 = vmatprep.subr.mxu0 0.0
    %88 = vmatpush1.msra.mxu0 0.0
    %89 = vmatprep.subr.mxu0 0.0
    %90 = vmatpush1.msra.mxu0 0.0
    %91 = vmatprep.subr.mxu0 0.0
    %92 = vmatpush1.msra.mxu0 0.0
    %93 = vmatprep.subr.mxu0 0.0
    %94 = vmatpush1.msra.mxu0 0.0
    %95 = vmatprep.subr.mxu0 0.0
    %96 = vmatpush1.msra.mxu0 0.0
    %97 = vmatprep.subr.mxu0 0.0
    %98 = vmatpush1.msra.mxu0 0.0
    %99 = vmatprep.subr.mxu0 0.0
    %100 = vmatpush1.msra.mxu0 0.0
    %101 = vmatprep.subr.mxu0 %v37
    %102 = vmatpush1.msra.mxu0 %v36
    %103 = vmatprep.subr.mxu0 0.0
    %104 = vmatpush2.msra.mxu0 0.0
    %105 = vmatprep.subr.mxu0 0.0
    %106 = vmatpush2.msra.mxu0 0.0
    %107 = vmatprep.subr.mxu0 0.0
    %108 = vmatpush2.msra.mxu0 0.0
    %109 = vmatprep.subr.mxu0 0.0
    %110 = vmatpush2.msra.mxu0 0.0
    %111 = vmatprep.subr.mxu0 0.0
    %112 = vmatpush2.msra.mxu0 0.0
    %113 = vmatprep.subr.mxu0 0.0
    %114 = vmatpush2.msra.mxu0 0.0
    %115 = vmatprep.subr.mxu0 0.0
    %116 = vmatpush2.msra.mxu0 0.0
    %117 = vmatprep.subr.mxu0 0.0
    %118 = vmatpush2.msra.mxu0 0.0
    %119 = vmatprep.subr.mxu0 0.0
    %120 = vmatpush2.msra.mxu0 0.0
    %121 = vmatprep.subr.mxu0 0.0
    %122 = vmatpush2.msra.mxu0 0.0
    %123 = vmatprep.subr.mxu0 0.0
    %124 = vmatpush2.msra.mxu0 0.0
    %125 = vmatprep.subr.mxu0 0.0
    %126 = vmatpush2.msra.mxu0 0.0
    %127 = vmatprep.subr.mxu0 0.0
    %128 = vmatpush2.msra.mxu0 0.0
    %129 = vmatprep.subr.mxu0 0.0
    %130 = vmatpush2.msra.mxu0 0.0
    %131 = vmatprep.subr.mxu0 0.0
    %132 = vmatpush2.msra.mxu0 0.0
    %133 = vmatprep.subr.mxu0 0.0
    %134 = vmatpush2.msra.mxu0 0.0
    %135 = vmatprep.mubr.f32.mxu0 0.0
    %136 = vmatmul.mubr.f32.gmra.mxu0 %v63
    %v137 = vpop.f32.mrf.mxu0
    %v138 = vadd.f32 %v49, %v137
    %v139 = vpop.f32.mrf.mxu0
    %v140 = vadd.f32 %v49, %v139
    %141 = vmatprep.mubr.f32.mxu0 0.0
    %142 = vmatmul.mubr.f32.gmra.mxu0 %v66
    %v143 = vpop.f32.mrf.mxu0
    %v144 = vadd.f32 %v54, %v143
    %v145 = vpop.f32.mrf.mxu0
    %v146 = vadd.f32 %v54, %v145
    %147 = vmatprep.mubr.f32.mxu0 0.0
    %148 = vmatmul.mubr.f32.gmra.mxu0 %v69
    %v149 = vpop.f32.mrf.mxu0
    %v150 = vadd.f32 %v59, %v149
    %v151 = vpop.f32.mrf.mxu0
    %v152 = vadd.f32 %v59, %v151
    %153 = vdwg.mxu0
    %154 = vmatprep.subr.mxu0 0.0
    %155 = vmatpush1.msra.mxu0 0.0
    %156 = vmatprep.subr.mxu0 0.0
    %157 = vmatpush1.msra.mxu0 0.0
    %158 = vmatprep.subr.mxu0 0.0
    %159 = vmatpush1.msra.mxu0 0.0
    %160 = vmatprep.subr.mxu0 0.0
    %161 = vmatpush1.msra.mxu0 0.0
    %162 = vmatprep.subr.mxu0 0.0
    %163 = vmatpush1.msra.mxu0 0.0
    %164 = vmatprep.subr.mxu0 0.0
    %165 = vmatpush1.msra.mxu0 0.0
    %166 = vmatprep.subr.mxu0 0.0
    %167 = vmatpush1.msra.mxu0 0.0
    %168 = vmatprep.subr.mxu0 0.0
    %169 = vmatpush1.msra.mxu0 0.0
    %170 = vmatprep.subr.mxu0 0.0
    %171 = vmatpush1.msra.mxu0 0.0
    %172 = vmatprep.subr.mxu0 0.0
    %173 = vmatpush1.msra.mxu0 0.0
    %174 = vmatprep.subr.mxu0 0.0
    %175 = vmatpush1.msra.mxu0 0.0
    %176 = vmatprep.subr.mxu0 0.0
    %177 = vmatpush1.msra.mxu0 0.0
    %178 = vmatprep.subr.mxu0 0.0
    %179 = vmatpush1.msra.mxu0 0.0
    %180 = vmatprep.subr.mxu0 0.0
    %181 = vmatpush1.msra.mxu0 0.0
    %182 = vmatprep.subr.mxu0 0.0
    %183 = vmatpush1.msra.mxu0 0.0
    %184 = vmatprep.subr.mxu0 %v39
    %185 = vmatpush1.msra.mxu0 %v38
    %186 = vmatprep.subr.mxu0 0.0
    %187 = vmatpush2.msra.mxu0 0.0
    %188 = vmatprep.subr.mxu0 0.0
    %189 = vmatpush2.msra.mxu0 0.0
    %190 = vmatprep.subr.mxu0 0.0
    %191 = vmatpush2.msra.mxu0 0.0
    %192 = vmatprep.subr.mxu0 0.0
    %193 = vmatpush2.msra.mxu0 0.0
    %194 = vmatprep.subr.mxu0 0.0
    %195 = vmatpush2.msra.mxu0 0.0
    %196 = vmatprep.subr.mxu0 0.0
    %197 = vmatpush2.msra.mxu0 0.0
    %198 = vmatprep.subr.mxu0 0.0
    %199 = vmatpush2.msra.mxu0 0.0
    %200 = vmatprep.subr.mxu0 0.0
    %201 = vmatpush2.msra.mxu0 0.0
    %202 = vmatprep.subr.mxu0 0.0
    %203 = vmatpush2.msra.mxu0 0.0
    %204 = vmatprep.subr.mxu0 0.0
    %205 = vmatpush2.msra.mxu0 0.0
    %206 = vmatprep.subr.mxu0 0.0
    %207 = vmatpush2.msra.mxu0 0.0
    %208 = vmatprep.subr.mxu0 0.0
    %209 = vmatpush2.msra.mxu0 0.0
    %210 = vmatprep.subr.mxu0 0.0
    %211 = vmatpush2.msra.mxu0 0.0
    %212 = vmatprep.subr.mxu0 0.0
    %213 = vmatpush2.msra.mxu0 0.0
    %214 = vmatprep.subr.mxu0 0.0
    %215 = vmatpush2.msra.mxu0 0.0
    %216 = vmatprep.subr.mxu0 0.0
    %217 = vmatpush2.msra.mxu0 0.0
    %218 = vmatprep.mubr.f32.mxu0 0.0
    %219 = vmatmul.mubr.f32.gmra.mxu0 %v63
    %v220 = vpop.f32.mrf.mxu0
    %v221 = vadd.f32 %v49, %v220
    %v222 = vpop.f32.mrf.mxu0
    %v223 = vadd.f32 %v49, %v222
    %224 = vmatprep.mubr.f32.mxu0 0.0
    %225 = vmatmul.mubr.f32.gmra.mxu0 %v66
    %v226 = vpop.f32.mrf.mxu0
    %v227 = vadd.f32 %v54, %v226
    %v228 = vpop.f32.mrf.mxu0
    %v229 = vadd.f32 %v54, %v228
    %230 = vmatprep.mubr.f32.mxu0 0.0
    %231 = vmatmul.mubr.f32.gmra.mxu0 %v69
    %v232 = vpop.f32.mrf.mxu0
    %v233 = vadd.f32 %v59, %v232
    %v234 = vpop.f32.mrf.mxu0
    %v235 = vadd.f32 %v59, %v234
    %236 = vdwg.mxu0
    %v237 = vmax.f32 %v138, 0.0
    %v238 = vmax.f32 %v140, 0.0
    %v239 = vmax.f32 %v221, 0.0
    %v240 = vmax.f32 %v223, 0.0
    %v241 = vmax.f32 %v144, 0.0
    %v242 = vmax.f32 %v146, 0.0
    %v243 = vmax.f32 %v227, 0.0
    %v244 = vmax.f32 %v229, 0.0
    %v245 = vmax.f32 %v150, 0.0
    %v246 = vmax.f32 %v152, 0.0
    %v247 = vmax.f32 %v233, 0.0
    %v248 = vmax.f32 %v235, 0.0
    %v249 = vld [vmem:[%s3] sm:$0xff]
    %v250 = vld [vmem:[%s3 + $0x8] sm:$0xff]
    %v251 = vld [vmem:[%s4] sm:$0xff]
    %v252 = vld [vmem:[%s4 + $0x8] sm:$0xff]
    %254 = vset.pattern.permute.xlu0 0
    %255 = vperm.xlu0 %254, %v251
    %v256 = vpop.permute.xlu0 %255
    %259 = vset.pattern.permute.xlu0 0
    %260 = vperm.xlu0 %259, %v252
    %v261 = vpop.permute.xlu0 %260
    %vm263 = vcmask 130048
    %v265 = vsel %vm263, %v249, 0
    %v268 = vsel %vm263, %v250, 0
    %270 = vmatprep.subr.mxu0 0.0
    %271 = vmatpush1.msra.mxu0 0.0
    %272 = vmatprep.subr.mxu0 0.0
    %273 = vmatpush1.msra.mxu0 0.0
    %274 = vmatprep.subr.mxu0 0.0
    %275 = vmatpush1.msra.mxu0 0.0
    %276 = vmatprep.subr.mxu0 0.0
    %277 = vmatpush1.msra.mxu0 0.0
    %278 = vmatprep.subr.mxu0 0.0
    %279 = vmatpush1.msra.mxu0 0.0
    %280 = vmatprep.subr.mxu0 0.0
    %281 = vmatpush1.msra.mxu0 0.0
    %282 = vmatprep.subr.mxu0 0.0
    %283 = vmatpush1.msra.mxu0 0.0
    %284 = vmatprep.subr.mxu0 0.0
    %285 = vmatpush1.msra.mxu0 0.0
    %286 = vmatprep.subr.mxu0 0.0
    %287 = vmatpush1.msra.mxu0 0.0
    %288 = vmatprep.subr.mxu0 0.0
    %289 = vmatpush1.msra.mxu0 0.0
    %290 = vmatprep.subr.mxu0 0.0
    %291 = vmatpush1.msra.mxu0 0.0
    %292 = vmatprep.subr.mxu0 0.0
    %293 = vmatpush1.msra.mxu0 0.0
    %294 = vmatprep.subr.mxu0 0.0
    %295 = vmatpush1.msra.mxu0 0.0
    %296 = vmatprep.subr.mxu0 0.0
    %297 = vmatpush1.msra.mxu0 0.0
    %298 = vmatprep.subr.mxu0 %v242
    %299 = vmatpush1.msra.mxu0 %v241
    %300 = vmatprep.subr.mxu0 %v238
    %301 = vmatpush1.msra.mxu0 %v237
    %302 = vmatprep.subr.mxu0 0.0
    %303 = vmatpush2.msra.mxu0 0.0
    %304 = vmatprep.subr.mxu0 0.0
    %305 = vmatpush2.msra.mxu0 0.0
    %306 = vmatprep.subr.mxu0 0.0
    %307 = vmatpush2.msra.mxu0 0.0
    %308 = vmatprep.subr.mxu0 0.0
    %309 = vmatpush2.msra.mxu0 0.0
    %310 = vmatprep.subr.mxu0 0.0
    %311 = vmatpush2.msra.mxu0 0.0
    %312 = vmatprep.subr.mxu0 0.0
    %313 = vmatpush2.msra.mxu0 0.0
    %314 = vmatprep.subr.mxu0 0.0
    %315 = vmatpush2.msra.mxu0 0.0
    %316 = vmatprep.subr.mxu0 0.0
    %317 = vmatpush2.msra.mxu0 0.0
    %318 = vmatprep.subr.mxu0 0.0
    %319 = vmatpush2.msra.mxu0 0.0
    %320 = vmatprep.subr.mxu0 0.0
    %321 = vmatpush2.msra.mxu0 0.0
    %322 = vmatprep.subr.mxu0 0.0
    %323 = vmatpush2.msra.mxu0 0.0
    %324 = vmatprep.subr.mxu0 0.0
    %325 = vmatpush2.msra.mxu0 0.0
    %326 = vmatprep.subr.mxu0 0.0
    %327 = vmatpush2.msra.mxu0 0.0
    %328 = vmatprep.subr.mxu0 0.0
    %329 = vmatpush2.msra.mxu0 0.0
    %330 = vmatprep.subr.mxu0 0.0
    %331 = vmatpush2.msra.mxu0 0.0
    %332 = vmatprep.subr.mxu0 0.0
    %333 = vmatpush2.msra.mxu0 0.0
    %334 = vmatprep.mubr.f32.mxu0 0.0
    %335 = vmatmul.mubr.f32.gmra.mxu0 %v265
    %v336 = vpop.f32.mrf.mxu0
    %v337 = vadd.f32 %v256, %v336
    %v338 = vpop.f32.mrf.mxu0
    %v339 = vadd.f32 %v256, %v338
    %340 = vmatprep.mubr.f32.mxu0 0.0
    %341 = vmatmul.mubr.f32.gmra.mxu0 %v268
    %v342 = vpop.f32.mrf.mxu0
    %v343 = vadd.f32 %v261, %v342
    %v344 = vpop.f32.mrf.mxu0
    %v345 = vadd.f32 %v261, %v344
    %346 = vdwg.mxu0
    %347 = vmatprep.subr.mxu0 0.0
    %348 = vmatpush1.msra.mxu0 0.0
    %349 = vmatprep.subr.mxu0 0.0
    %350 = vmatpush1.msra.mxu0 0.0
    %351 = vmatprep.subr.mxu0 0.0
    %352 = vmatpush1.msra.mxu0 0.0
    %353 = vmatprep.subr.mxu0 0.0
    %354 = vmatpush1.msra.mxu0 0.0
    %355 = vmatprep.subr.mxu0 0.0
    %356 = vmatpush1.msra.mxu0 0.0
    %357 = vmatprep.subr.mxu0 0.0
    %358 = vmatpush1.msra.mxu0 0.0
    %359 = vmatprep.subr.mxu0 0.0
    %360 = vmatpush1.msra.mxu0 0.0
    %361 = vmatprep.subr.mxu0 0.0
    %362 = vmatpush1.msra.mxu0 0.0
    %363 = vmatprep.subr.mxu0 0.0
    %364 = vmatpush1.msra.mxu0 0.0
    %365 = vmatprep.subr.mxu0 0.0
    %366 = vmatpush1.msra.mxu0 0.0
    %367 = vmatprep.subr.mxu0 0.0
    %368 = vmatpush1.msra.mxu0 0.0
    %369 = vmatprep.subr.mxu0 0.0
    %370 = vmatpush1.msra.mxu0 0.0
    %371 = vmatprep.subr.mxu0 0.0
    %372 = vmatpush1.msra.mxu0 0.0
    %373 = vmatprep.subr.mxu0 0.0
    %374 = vmatpush1.msra.mxu0 0.0
    %375 = vmatprep.subr.mxu0 %v244
    %376 = vmatpush1.msra.mxu0 %v243
    %377 = vmatprep.subr.mxu0 %v240
    %378 = vmatpush1.msra.mxu0 %v239
    %379 = vmatprep.subr.mxu0 0.0
    %380 = vmatpush2.msra.mxu0 0.0
    %381 = vmatprep.subr.mxu0 0.0
    %382 = vmatpush2.msra.mxu0 0.0
    %383 = vmatprep.subr.mxu0 0.0
    %384 = vmatpush2.msra.mxu0 0.0
    %385 = vmatprep.subr.mxu0 0.0
    %386 = vmatpush2.msra.mxu0 0.0
    %387 = vmatprep.subr.mxu0 0.0
    %388 = vmatpush2.msra.mxu0 0.0
    %389 = vmatprep.subr.mxu0 0.0
    %390 = vmatpush2.msra.mxu0 0.0
    %391 = vmatprep.subr.mxu0 0.0
    %392 = vmatpush2.msra.mxu0 0.0
    %393 = vmatprep.subr.mxu0 0.0
    %394 = vmatpush2.msra.mxu0 0.0
    %395 = vmatprep.subr.mxu0 0.0
    %396 = vmatpush2.msra.mxu0 0.0
    %397 = vmatprep.subr.mxu0 0.0
    %398 = vmatpush2.msra.mxu0 0.0
    %399 = vmatprep.subr.mxu0 0.0
    %400 = vmatpush2.msra.mxu0 0.0
    %401 = vmatprep.subr.mxu0 0.0
    %402 = vmatpush2.msra.mxu0 0.0
    %403 = vmatprep.subr.mxu0 0.0
    %404 = vmatpush2.msra.mxu0 0.0
    %405 = vmatprep.subr.mxu0 0.0
    %406 = vmatpush2.msra.mxu0 0.0
    %407 = vmatprep.subr.mxu0 0.0
    %408 = vmatpush2.msra.mxu0 0.0
    %409 = vmatprep.subr.mxu0 0.0
    %410 = vmatpush2.msra.mxu0 0.0
    %411 = vmatprep.mubr.f32.mxu0 0.0
    %412 = vmatmul.mubr.f32.gmra.mxu0 %v265
    %v413 = vpop.f32.mrf.mxu0
    %v414 = vadd.f32 %v256, %v413
    %v415 = vpop.f32.mrf.mxu0
    %v416 = vadd.f32 %v256, %v415
    %417 = vmatprep.mubr.f32.mxu0 0.0
    %418 = vmatmul.mubr.f32.gmra.mxu0 %v268
    %v419 = vpop.f32.mrf.mxu0
    %v420 = vadd.f32 %v261, %v419
    %v421 = vpop.f32.mrf.mxu0
    %v422 = vadd.f32 %v261, %v421
    %423 = vdwg.mxu0
    %v424 = vmax.f32 %v337, 0.0
    %v425 = vmax.f32 %v339, 0.0
    %v426 = vmax.f32 %v414, 0.0
    %v427 = vmax.f32 %v416, 0.0
    %v428 = vmax.f32 %v343, 0.0
    %v429 = vmax.f32 %v345, 0.0
    %v430 = vmax.f32 %v420, 0.0
    %v431 = vmax.f32 %v422, 0.0
    %v432 = vld [vmem:[%s5] sm:$0xff]
    %v433 = vld [vmem:[%s5 + $0x8] sm:$0xff]
    %v434 = vld [vmem:[%s5 + $0x10] sm:$0xff]
    %v435 = vld [vmem:[%s5 + $0x18] sm:$0xff]
    %v436 = vld [vmem:[%s5 + $0x20] sm:$0x1]
    %v437 = vld [vmem:[%s5 + $0x28] sm:$0x1]
    %v438 = vld [vmem:[%s5 + $0x30] sm:$0x1]
    %v439 = vld [vmem:[%s5 + $0x38] sm:$0x1]
    %440 = vrot.lane.b32.xlu0 %v428, 17
    %v441 = vpop.permute.xlu0 %440
    %442 = vrot.lane.b32.xlu0 %v429, 17
    %v443 = vpop.permute.xlu0 %442
    %444 = vrot.lane.b32.xlu0 %v430, 17
    %v445 = vpop.permute.xlu0 %444
    %446 = vrot.lane.b32.xlu0 %v431, 17
    %v447 = vpop.permute.xlu0 %446
    %v448 = vlaneseq
    %v449 = vand.u32 %v448, 127
    %vm450 = vcmp.lt.s32.totalorder %v449, 17
    %v451 = vsel %vm450, %v445, %v447
    %v452 = vsel %vm450, %v443, %v445
    %v453 = vsel %vm450, %v441, %v443
    %v454 = vsel %vm450, %v447, %v441
    %v455 = vmul.f32 %v424, %v454
    %v456 = vmul.f32 %v425, %v453
    %v457 = vmul.f32 %v426, %v452
    %v458 = vmul.f32 %v427, %v451
    %v459 = vrot.slane %v455, 4
    %v460 = vadd.f32 %v455, %v459
    %v461 = vrot.slane %v460, 2
    %v462 = vadd.f32 %v460, %v461
    %v463 = vrot.slane %v462, 1
    %v464 = vadd.f32 %v462, %v463
    %v465 = vrot.slane %v456, 4
    %v466 = vadd.f32 %v456, %v465
    %v467 = vrot.slane %v466, 2
    %v468 = vadd.f32 %v466, %v467
    %v469 = vrot.slane %v468, 1
    %v470 = vadd.f32 %v468, %v469
    %v471 = vrot.slane %v457, 4
    %v472 = vadd.f32 %v457, %v471
    %v473 = vrot.slane %v472, 2
    %v474 = vadd.f32 %v472, %v473
    %v475 = vrot.slane %v474, 1
    %v476 = vadd.f32 %v474, %v475
    %v477 = vrot.slane %v458, 4
    %v478 = vadd.f32 %v458, %v477
    %v479 = vrot.slane %v478, 2
    %v480 = vadd.f32 %v478, %v479
    %v481 = vrot.slane %v480, 1
    %v482 = vadd.f32 %v480, %v481
    %483 = vrot.lane.b32.xlu0 %v428, 16
    %v484 = vpop.permute.xlu0 %483
    %485 = vrot.lane.b32.xlu0 %v429, 16
    %v486 = vpop.permute.xlu0 %485
    %487 = vrot.lane.b32.xlu0 %v430, 16
    %v488 = vpop.permute.xlu0 %487
    %489 = vrot.lane.b32.xlu0 %v431, 16
    %v490 = vpop.permute.xlu0 %489
    %vm491 = vcmp.lt.s32.totalorder %v449, 16
    %v492 = vsel %vm491, %v488, %v490
    %v493 = vsel %vm491, %v486, %v488
    %v494 = vsel %vm491, %v484, %v486
    %v495 = vsel %vm491, %v490, %v484
    %v496 = vmul.f32 %v424, %v495
    %v497 = vmul.f32 %v425, %v494
    %v498 = vmul.f32 %v426, %v493
    %v499 = vmul.f32 %v427, %v492
    %v500 = vrot.slane %v496, 4
    %v501 = vadd.f32 %v496, %v500
    %v502 = vrot.slane %v501, 2
    %v503 = vadd.f32 %v501, %v502
    %v504 = vrot.slane %v503, 1
    %v505 = vadd.f32 %v503, %v504
    %v506 = vrot.slane %v497, 4
    %v507 = vadd.f32 %v497, %v506
    %v508 = vrot.slane %v507, 2
    %v509 = vadd.f32 %v507, %v508
    %v510 = vrot.slane %v509, 1
    %v511 = vadd.f32 %v509, %v510
    %v512 = vrot.slane %v498, 4
    %v513 = vadd.f32 %v498, %v512
    %v514 = vrot.slane %v513, 2
    %v515 = vadd.f32 %v513, %v514
    %v516 = vrot.slane %v515, 1
    %v517 = vadd.f32 %v515, %v516
    %v518 = vrot.slane %v499, 4
    %v519 = vadd.f32 %v499, %v518
    %v520 = vrot.slane %v519, 2
    %v521 = vadd.f32 %v519, %v520
    %v522 = vrot.slane %v521, 1
    %v523 = vadd.f32 %v521, %v522
    %524 = vrot.lane.b32.xlu0 %v428, 15
    %v525 = vpop.permute.xlu0 %524
    %526 = vrot.lane.b32.xlu0 %v429, 15
    %v527 = vpop.permute.xlu0 %526
    %528 = vrot.lane.b32.xlu0 %v430, 15
    %v529 = vpop.permute.xlu0 %528
    %530 = vrot.lane.b32.xlu0 %v431, 15
    %v531 = vpop.permute.xlu0 %530
    %vm532 = vcmp.lt.s32.totalorder %v449, 15
    %v533 = vsel %vm532, %v529, %v531
    %v534 = vsel %vm532, %v527, %v529
    %v535 = vsel %vm532, %v525, %v527
    %v536 = vsel %vm532, %v531, %v525
    %v537 = vmul.f32 %v424, %v536
    %v538 = vmul.f32 %v425, %v535
    %v539 = vmul.f32 %v426, %v534
    %v540 = vmul.f32 %v427, %v533
    %v541 = vrot.slane %v537, 4
    %v542 = vadd.f32 %v537, %v541
    %v543 = vrot.slane %v542, 2
    %v544 = vadd.f32 %v542, %v543
    %v545 = vrot.slane %v544, 1
    %v546 = vadd.f32 %v544, %v545
    %v547 = vrot.slane %v538, 4
    %v548 = vadd.f32 %v538, %v547
    %v549 = vrot.slane %v548, 2
    %v550 = vadd.f32 %v548, %v549
    %v551 = vrot.slane %v550, 1
    %v552 = vadd.f32 %v550, %v551
    %v553 = vrot.slane %v539, 4
    %v554 = vadd.f32 %v539, %v553
    %v555 = vrot.slane %v554, 2
    %v556 = vadd.f32 %v554, %v555
    %v557 = vrot.slane %v556, 1
    %v558 = vadd.f32 %v556, %v557
    %v559 = vrot.slane %v540, 4
    %v560 = vadd.f32 %v540, %v559
    %v561 = vrot.slane %v560, 2
    %v562 = vadd.f32 %v560, %v561
    %v563 = vrot.slane %v562, 1
    %v564 = vadd.f32 %v562, %v563
    %565 = vrot.lane.b32.xlu0 %v428, 1
    %v566 = vpop.permute.xlu0 %565
    %567 = vrot.lane.b32.xlu0 %v429, 1
    %v568 = vpop.permute.xlu0 %567
    %569 = vrot.lane.b32.xlu0 %v430, 1
    %v570 = vpop.permute.xlu0 %569
    %571 = vrot.lane.b32.xlu0 %v431, 1
    %v572 = vpop.permute.xlu0 %571
    %vm573 = vcmp.lt.s32.totalorder %v449, 1
    %v574 = vsel %vm573, %v570, %v572
    %v575 = vsel %vm573, %v568, %v570
    %v576 = vsel %vm573, %v566, %v568
    %v577 = vsel %vm573, %v572, %v566
    %v578 = vmul.f32 %v424, %v577
    %v579 = vmul.f32 %v425, %v576
    %v580 = vmul.f32 %v426, %v575
    %v581 = vmul.f32 %v427, %v574
    %v582 = vrot.slane %v578, 4
    %v583 = vadd.f32 %v578, %v582
    %v584 = vrot.slane %v583, 2
    %v585 = vadd.f32 %v583, %v584
    %v586 = vrot.slane %v585, 1
    %v587 = vadd.f32 %v585, %v586
    %v588 = vrot.slane %v579, 4
    %v589 = vadd.f32 %v579, %v588
    %v590 = vrot.slane %v589, 2
    %v591 = vadd.f32 %v589, %v590
    %v592 = vrot.slane %v591, 1
    %v593 = vadd.f32 %v591, %v592
    %v594 = vrot.slane %v580, 4
    %v595 = vadd.f32 %v580, %v594
    %v596 = vrot.slane %v595, 2
    %v597 = vadd.f32 %v595, %v596
    %v598 = vrot.slane %v597, 1
    %v599 = vadd.f32 %v597, %v598
    %v600 = vrot.slane %v581, 4
    %v601 = vadd.f32 %v581, %v600
    %v602 = vrot.slane %v601, 2
    %v603 = vadd.f32 %v601, %v602
    %v604 = vrot.slane %v603, 1
    %v605 = vadd.f32 %v603, %v604
    %v606 = vmul.f32 %v424, %v428
    %v607 = vmul.f32 %v425, %v429
    %v608 = vmul.f32 %v426, %v430
    %v609 = vmul.f32 %v427, %v431
    %v610 = vrot.slane %v606, 4
    %v611 = vadd.f32 %v606, %v610
    %v612 = vrot.slane %v611, 2
    %v613 = vadd.f32 %v611, %v612
    %v614 = vrot.slane %v613, 1
    %v615 = vadd.f32 %v613, %v614
    %v616 = vrot.slane %v607, 4
    %v617 = vadd.f32 %v607, %v616
    %v618 = vrot.slane %v617, 2
    %v619 = vadd.f32 %v617, %v618
    %v620 = vrot.slane %v619, 1
    %v621 = vadd.f32 %v619, %v620
    %v622 = vrot.slane %v608, 4
    %v623 = vadd.f32 %v608, %v622
    %v624 = vrot.slane %v623, 2
    %v625 = vadd.f32 %v623, %v624
    %v626 = vrot.slane %v625, 1
    %v627 = vadd.f32 %v625, %v626
    %v628 = vrot.slane %v609, 4
    %v629 = vadd.f32 %v609, %v628
    %v630 = vrot.slane %v629, 2
    %v631 = vadd.f32 %v629, %v630
    %v632 = vrot.slane %v631, 1
    %v633 = vadd.f32 %v631, %v632
    %634 = vrot.lane.b32.xlu0 %v428, 127
    %v635 = vpop.permute.xlu0 %634
    %636 = vrot.lane.b32.xlu0 %v429, 127
    %v637 = vpop.permute.xlu0 %636
    %638 = vrot.lane.b32.xlu0 %v430, 127
    %v639 = vpop.permute.xlu0 %638
    %640 = vrot.lane.b32.xlu0 %v431, 127
    %v641 = vpop.permute.xlu0 %640
    %vm642 = vcmp.lt.s32.totalorder %v449, 127
    %v643 = vsel %vm642, %v639, %v641
    %v644 = vsel %vm642, %v637, %v639
    %v645 = vsel %vm642, %v635, %v637
    %v646 = vsel %vm642, %v641, %v635
    %v647 = vmul.f32 %v424, %v645
    %v648 = vmul.f32 %v425, %v644
    %v649 = vmul.f32 %v426, %v643
    %v650 = vmul.f32 %v427, %v646
    %v651 = vrot.slane %v647, 4
    %v652 = vadd.f32 %v647, %v651
    %v653 = vrot.slane %v652, 2
    %v654 = vadd.f32 %v652, %v653
    %v655 = vrot.slane %v654, 1
    %v656 = vadd.f32 %v654, %v655
    %v657 = vrot.slane %v648, 4
    %v658 = vadd.f32 %v648, %v657
    %v659 = vrot.slane %v658, 2
    %v660 = vadd.f32 %v658, %v659
    %v661 = vrot.slane %v660, 1
    %v662 = vadd.f32 %v660, %v661
    %v663 = vrot.slane %v649, 4
    %v664 = vadd.f32 %v649, %v663
    %v665 = vrot.slane %v664, 2
    %v666 = vadd.f32 %v664, %v665
    %v667 = vrot.slane %v666, 1
    %v668 = vadd.f32 %v666, %v667
    %v669 = vrot.slane %v650, 4
    %v670 = vadd.f32 %v650, %v669
    %v671 = vrot.slane %v670, 2
    %v672 = vadd.f32 %v670, %v671
    %v673 = vrot.slane %v672, 1
    %v674 = vadd.f32 %v672, %v673
    %675 = vrot.lane.b32.xlu0 %v428, 113
    %v676 = vpop.permute.xlu0 %675
    %677 = vrot.lane.b32.xlu0 %v429, 113
    %v678 = vpop.permute.xlu0 %677
    %679 = vrot.lane.b32.xlu0 %v430, 113
    %v680 = vpop.permute.xlu0 %679
    %681 = vrot.lane.b32.xlu0 %v431, 113
    %v682 = vpop.permute.xlu0 %681
    %vm683 = vcmp.lt.s32.totalorder %v449, 113
    %v684 = vsel %vm683, %v680, %v682
    %v685 = vsel %vm683, %v678, %v680
    %v686 = vsel %vm683, %v676, %v678
    %v687 = vsel %vm683, %v682, %v676
    %v688 = vmul.f32 %v424, %v686
    %v689 = vmul.f32 %v425, %v685
    %v690 = vmul.f32 %v426, %v684
    %v691 = vmul.f32 %v427, %v687
    %v692 = vrot.slane %v688, 4
    %v693 = vadd.f32 %v688, %v692
    %v694 = vrot.slane %v693, 2
    %v695 = vadd.f32 %v693, %v694
    %v696 = vrot.slane %v695, 1
    %v697 = vadd.f32 %v695, %v696
    %v698 = vrot.slane %v689, 4
    %v699 = vadd.f32 %v689, %v698
    %v700 = vrot.slane %v699, 2
    %v701 = vadd.f32 %v699, %v700
    %v702 = vrot.slane %v701, 1
    %v703 = vadd.f32 %v701, %v702
    %v704 = vrot.slane %v690, 4
    %v705 = vadd.f32 %v690, %v704
    %v706 = vrot.slane %v705, 2
    %v707 = vadd.f32 %v705, %v706
    %v708 = vrot.slane %v707, 1
    %v709 = vadd.f32 %v707, %v708
    %v710 = vrot.slane %v691, 4
    %v711 = vadd.f32 %v691, %v710
    %v712 = vrot.slane %v711, 2
    %v713 = vadd.f32 %v711, %v712
    %v714 = vrot.slane %v713, 1
    %v715 = vadd.f32 %v713, %v714
    %716 = vrot.lane.b32.xlu0 %v428, 112
    %v717 = vpop.permute.xlu0 %716
    %718 = vrot.lane.b32.xlu0 %v429, 112
    %v719 = vpop.permute.xlu0 %718
    %720 = vrot.lane.b32.xlu0 %v430, 112
    %v721 = vpop.permute.xlu0 %720
    %722 = vrot.lane.b32.xlu0 %v431, 112
    %v723 = vpop.permute.xlu0 %722
    %vm724 = vcmp.lt.s32.totalorder %v449, 112
    %v725 = vsel %vm724, %v721, %v723
    %v726 = vsel %vm724, %v719, %v721
    %v727 = vsel %vm724, %v717, %v719
    %v728 = vsel %vm724, %v723, %v717
    %v729 = vmul.f32 %v424, %v727
    %v730 = vmul.f32 %v425, %v726
    %v731 = vmul.f32 %v426, %v725
    %v732 = vmul.f32 %v427, %v728
    %v733 = vrot.slane %v729, 4
    %v734 = vadd.f32 %v729, %v733
    %v735 = vrot.slane %v734, 2
    %v736 = vadd.f32 %v734, %v735
    %v737 = vrot.slane %v736, 1
    %v738 = vadd.f32 %v736, %v737
    %v739 = vrot.slane %v730, 4
    %v740 = vadd.f32 %v730, %v739
    %v741 = vrot.slane %v740, 2
    %v742 = vadd.f32 %v740, %v741
    %v743 = vrot.slane %v742, 1
    %v744 = vadd.f32 %v742, %v743
    %v745 = vrot.slane %v731, 4
    %v746 = vadd.f32 %v731, %v745
    %v747 = vrot.slane %v746, 2
    %v748 = vadd.f32 %v746, %v747
    %v749 = vrot.slane %v748, 1
    %v750 = vadd.f32 %v748, %v749
    %v751 = vrot.slane %v732, 4
    %v752 = vadd.f32 %v732, %v751
    %v753 = vrot.slane %v752, 2
    %v754 = vadd.f32 %v752, %v753
    %v755 = vrot.slane %v754, 1
    %v756 = vadd.f32 %v754, %v755
    %757 = vrot.lane.b32.xlu0 %v428, 111
    %v758 = vpop.permute.xlu0 %757
    %759 = vrot.lane.b32.xlu0 %v429, 111
    %v760 = vpop.permute.xlu0 %759
    %761 = vrot.lane.b32.xlu0 %v430, 111
    %v762 = vpop.permute.xlu0 %761
    %763 = vrot.lane.b32.xlu0 %v431, 111
    %v764 = vpop.permute.xlu0 %763
    %vm765 = vcmp.lt.s32.totalorder %v449, 111
    %v766 = vsel %vm765, %v762, %v764
    %v767 = vsel %vm765, %v760, %v762
    %v768 = vsel %vm765, %v758, %v760
    %v769 = vsel %vm765, %v764, %v758
    %v770 = vmul.f32 %v424, %v768
    %v771 = vmul.f32 %v425, %v767
    %v772 = vmul.f32 %v426, %v766
    %v773 = vmul.f32 %v427, %v769
    %v774 = vrot.slane %v770, 4
    %v775 = vadd.f32 %v770, %v774
    %v776 = vrot.slane %v775, 2
    %v777 = vadd.f32 %v775, %v776
    %v778 = vrot.slane %v777, 1
    %v779 = vadd.f32 %v777, %v778
    %v780 = vrot.slane %v771, 4
    %v781 = vadd.f32 %v771, %v780
    %v782 = vrot.slane %v781, 2
    %v783 = vadd.f32 %v781, %v782
    %v784 = vrot.slane %v783, 1
    %v785 = vadd.f32 %v783, %v784
    %v786 = vrot.slane %v772, 4
    %v787 = vadd.f32 %v772, %v786
    %v788 = vrot.slane %v787, 2
    %v789 = vadd.f32 %v787, %v788
    %v790 = vrot.slane %v789, 1
    %v791 = vadd.f32 %v789, %v790
    %v792 = vrot.slane %v773, 4
    %v793 = vadd.f32 %v773, %v792
    %v794 = vrot.slane %v793, 2
    %v795 = vadd.f32 %v793, %v794
    %v796 = vrot.slane %v795, 1
    %v797 = vadd.f32 %v795, %v796
    %vm798 = vcmask 1040384
    %v799 = vsel %vm798, %v464, %v505
    %v800 = vsel %vm798, %v470, %v511
    %v801 = vsel %vm798, %v476, %v517
    %v802 = vsel %vm798, %v482, %v523
    %vm803 = vcmask 1041408
    %v804 = vsel %vm803, %v799, %v546
    %v805 = vsel %vm803, %v800, %v552
    %v806 = vsel %vm803, %v801, %v558
    %v807 = vsel %vm803, %v802, %v564
    %vm808 = vcmask 1042432
    %v809 = vsel %vm808, %v804, %v587
    %v810 = vsel %vm808, %v805, %v593
    %v811 = vsel %vm808, %v806, %v599
    %v812 = vsel %vm808, %v807, %v605
    %vm813 = vcmask 1043456
    %v814 = vsel %vm813, %v809, %v615
    %v815 = vsel %vm813, %v810, %v621
    %v816 = vsel %vm813, %v811, %v627
    %v817 = vsel %vm813, %v812, %v633
    %vm818 = vcmask 1044480
    %v819 = vsel %vm818, %v814, %v656
    %v820 = vsel %vm818, %v815, %v662
    %v821 = vsel %vm818, %v816, %v668
    %v822 = vsel %vm818, %v817, %v674
    %vm823 = vcmask 1045504
    %v824 = vsel %vm823, %v819, %v697
    %v825 = vsel %vm823, %v820, %v703
    %v826 = vsel %vm823, %v821, %v709
    %v827 = vsel %vm823, %v822, %v715
    %vm828 = vcmask 1046528
    %v829 = vsel %vm828, %v824, %v738
    %v830 = vsel %vm828, %v825, %v744
    %v831 = vsel %vm828, %v826, %v750
    %v832 = vsel %vm828, %v827, %v756
    %v833 = vmul.f32 %v829, %v432
    %v834 = vmul.f32 %v830, %v433
    %v835 = vmul.f32 %v831, %v434
    %v836 = vmul.f32 %v832, %v435
    %v837 = vmul.f32 %v779, %v436
    %v838 = vmul.f32 %v785, %v437
    %v839 = vmul.f32 %v791, %v438
    %v840 = vmul.f32 %v797, %v439
    %v841 = vsel %vm798, %v837, -inf
    %v842 = vmax.f32 %v833, %v841
    %v843 = vrot.slane %v842, 4
    %v844 = vmax.f32 %v842, %v843
    %v845 = vrot.slane %v844, 2
    %v846 = vmax.f32 %v844, %v845
    %v847 = vrot.slane %v846, 1
    %v848 = vmax.f32 %v846, %v847
    %v849 = vsel %vm798, %v838, -inf
    %v850 = vmax.f32 %v834, %v849
    %v851 = vrot.slane %v850, 4
    %v852 = vmax.f32 %v850, %v851
    %v853 = vrot.slane %v852, 2
    %v854 = vmax.f32 %v852, %v853
    %v855 = vrot.slane %v854, 1
    %v856 = vmax.f32 %v854, %v855
    %v857 = vsel %vm798, %v839, -inf
    %v858 = vmax.f32 %v835, %v857
    %v859 = vrot.slane %v858, 4
    %v860 = vmax.f32 %v858, %v859
    %v861 = vrot.slane %v860, 2
    %v862 = vmax.f32 %v860, %v861
    %v863 = vrot.slane %v862, 1
    %v864 = vmax.f32 %v862, %v863
    %v865 = vsel %vm798, %v840, -inf
    %v866 = vmax.f32 %v836, %v865
    %v867 = vrot.slane %v866, 4
    %v868 = vmax.f32 %v866, %v867
    %v869 = vrot.slane %v868, 2
    %v870 = vmax.f32 %v868, %v869
    %v871 = vrot.slane %v870, 1
    %v872 = vmax.f32 %v870, %v871
    %v873 = vsub.f32 %v833, %v848
    %v874 = vsub.f32 %v834, %v856
    %v875 = vsub.f32 %v835, %v864
    %v876 = vsub.f32 %v836, %v872
    %v877 = vsub.f32 %v837, %v848
    %v878 = vsub.f32 %v838, %v856
    %v879 = vsub.f32 %v839, %v864
    %v880 = vsub.f32 %v840, %v872
    %v881 = vmul.f32 %v873, 1.442695
    %v882 = vpow.pop %v881
    %v883 = vmul.f32 %v874, 1.442695
    %v884 = vpow.pop %v883
    %v885 = vmul.f32 %v875, 1.442695
    %v886 = vpow.pop %v885
    %v887 = vmul.f32 %v876, 1.442695
    %v888 = vpow.pop %v887
    %v889 = vmul.f32 %v877, 1.442695
    %v890 = vpow.pop %v889
    %v891 = vmul.f32 %v878, 1.442695
    %v892 = vpow.pop %v891
    %v893 = vmul.f32 %v879, 1.442695
    %v894 = vpow.pop %v893
    %v895 = vmul.f32 %v880, 1.442695
    %v896 = vpow.pop %v895
    %v897 = vsel %vm798, %v890, 0.0
    %v898 = vadd.f32 %v882, %v897
    %v899 = vrot.slane %v898, 4
    %v900 = vadd.f32 %v898, %v899
    %v901 = vrot.slane %v900, 2
    %v902 = vadd.f32 %v900, %v901
    %v903 = vrot.slane %v902, 1
    %v904 = vadd.f32 %v902, %v903
    %v905 = vsel %vm798, %v892, 0.0
    %v906 = vadd.f32 %v884, %v905
    %v907 = vrot.slane %v906, 4
    %v908 = vadd.f32 %v906, %v907
    %v909 = vrot.slane %v908, 2
    %v910 = vadd.f32 %v908, %v909
    %v911 = vrot.slane %v910, 1
    %v912 = vadd.f32 %v910, %v911
    %v913 = vsel %vm798, %v894, 0.0
    %v914 = vadd.f32 %v886, %v913
    %v915 = vrot.slane %v914, 4
    %v916 = vadd.f32 %v914, %v915
    %v917 = vrot.slane %v916, 2
    %v918 = vadd.f32 %v916, %v917
    %v919 = vrot.slane %v918, 1
    %v920 = vadd.f32 %v918, %v919
    %v921 = vsel %vm798, %v896, 0.0
    %v922 = vadd.f32 %v888, %v921
    %v923 = vrot.slane %v922, 4
    %v924 = vadd.f32 %v922, %v923
    %v925 = vrot.slane %v924, 2
    %v926 = vadd.f32 %v924, %v925
    %v927 = vrot.slane %v926, 1
    %v928 = vadd.f32 %v926, %v927
    %v929 = vrcp.pop %v904
    %v930 = vmul.f32 1.0, %v929
    %v931 = vrcp.pop %v912
    %v932 = vmul.f32 1.0, %v931
    %v933 = vrcp.pop %v920
    %v934 = vmul.f32 1.0, %v933
    %v935 = vrcp.pop %v928
    %v936 = vmul.f32 1.0, %v935
    %v937 = vmul.f32 %v882, %v432
    %v938 = vmul.f32 %v884, %v433
    %v939 = vmul.f32 %v886, %v434
    %v940 = vmul.f32 %v888, %v435
    %v941 = vmul.f32 %v890, %v436
    %v942 = vmul.f32 %v892, %v437
    %v943 = vmul.f32 %v894, %v438
    %v944 = vmul.f32 %v896, %v439
    %945 = vrot.lane.b32.xlu0 %v245, 17
    %v946 = vpop.permute.xlu0 %945
    %947 = vrot.lane.b32.xlu0 %v246, 17
    %v948 = vpop.permute.xlu0 %947
    %949 = vrot.lane.b32.xlu0 %v247, 17
    %v950 = vpop.permute.xlu0 %949
    %951 = vrot.lane.b32.xlu0 %v248, 17
    %v952 = vpop.permute.xlu0 %951
    %v953 = vsel %vm450, %v950, %v952
    %v954 = vsel %vm450, %v948, %v950
    %v955 = vsel %vm450, %v946, %v948
    %v956 = vsel %vm450, %v952, %v946
    %v957 = vlaneseq
    %v958 = vshrl.u32 %v957, 7
    %v959 = vsub.s32 0, %v958
    %v960 = vrot.slane %v937, %v959
    %v961 = vlaneseq
    %v962 = vshrl.u32 %v961, 7
    %v963 = vsub.s32 0, %v962
    %v964 = vrot.slane %v938, %v963
    %v965 = vlaneseq
    %v966 = vshrl.u32 %v965, 7
    %v967 = vsub.s32 0, %v966
    %v968 = vrot.slane %v939, %v967
    %v969 = vlaneseq
    %v970 = vshrl.u32 %v969, 7
    %v971 = vsub.s32 0, %v970
    %v972 = vrot.slane %v940, %v971
    %v973 = vmul.f32 %v960, %v956
    %v974 = vmul.f32 %v964, %v955
    %v975 = vmul.f32 %v968, %v954
    %v976 = vmul.f32 %v972, %v953
    %v977 = vadd.f32 %v973, 0.0
    %v978 = vadd.f32 %v974, 0.0
    %v979 = vadd.f32 %v975, 0.0
    %v980 = vadd.f32 %v976, 0.0
    %981 = vrot.lane.b32.xlu0 %v245, 16
    %v982 = vpop.permute.xlu0 %981
    %983 = vrot.lane.b32.xlu0 %v246, 16
    %v984 = vpop.permute.xlu0 %983
    %985 = vrot.lane.b32.xlu0 %v247, 16
    %v986 = vpop.permute.xlu0 %985
    %987 = vrot.lane.b32.xlu0 %v248, 16
    %v988 = vpop.permute.xlu0 %987
    %v989 = vsel %vm491, %v986, %v988
    %v990 = vsel %vm491, %v984, %v986
    %v991 = vsel %vm491, %v982, %v984
    %v992 = vsel %vm491, %v988, %v982
    %v993 = vlaneseq
    %v994 = vshrl.u32 %v993, 7
    %v995 = vsub.s32 1, %v994
    %v996 = vrot.slane %v937, %v995
    %v997 = vlaneseq
    %v998 = vshrl.u32 %v997, 7
    %v999 = vsub.s32 1, %v998
    %v1000 = vrot.slane %v938, %v999
    %v1001 = vlaneseq
    %v1002 = vshrl.u32 %v1001, 7
    %v1003 = vsub.s32 1, %v1002
    %v1004 = vrot.slane %v939, %v1003
    %v1005 = vlaneseq
    %v1006 = vshrl.u32 %v1005, 7
    %v1007 = vsub.s32 1, %v1006
    %v1008 = vrot.slane %v940, %v1007
    %v1009 = vmul.f32 %v996, %v992
    %v1010 = vmul.f32 %v1000, %v991
    %v1011 = vmul.f32 %v1004, %v990
    %v1012 = vmul.f32 %v1008, %v989
    %v1013 = vadd.f32 %v977, %v1009
    %v1014 = vadd.f32 %v978, %v1010
    %v1015 = vadd.f32 %v979, %v1011
    %v1016 = vadd.f32 %v980, %v1012
    %1017 = vrot.lane.b32.xlu0 %v245, 15
    %v1018 = vpop.permute.xlu0 %1017
    %1019 = vrot.lane.b32.xlu0 %v246, 15
    %v1020 = vpop.permute.xlu0 %1019
    %1021 = vrot.lane.b32.xlu0 %v247, 15
    %v1022 = vpop.permute.xlu0 %1021
    %1023 = vrot.lane.b32.xlu0 %v248, 15
    %v1024 = vpop.permute.xlu0 %1023
    %v1025 = vsel %vm532, %v1022, %v1024
    %v1026 = vsel %vm532, %v1020, %v1022
    %v1027 = vsel %vm532, %v1018, %v1020
    %v1028 = vsel %vm532, %v1024, %v1018
    %v1029 = vlaneseq
    %v1030 = vshrl.u32 %v1029, 7
    %v1031 = vsub.s32 2, %v1030
    %v1032 = vrot.slane %v937, %v1031
    %v1033 = vlaneseq
    %v1034 = vshrl.u32 %v1033, 7
    %v1035 = vsub.s32 2, %v1034
    %v1036 = vrot.slane %v938, %v1035
    %v1037 = vlaneseq
    %v1038 = vshrl.u32 %v1037, 7
    %v1039 = vsub.s32 2, %v1038
    %v1040 = vrot.slane %v939, %v1039
    %v1041 = vlaneseq
    %v1042 = vshrl.u32 %v1041, 7
    %v1043 = vsub.s32 2, %v1042
    %v1044 = vrot.slane %v940, %v1043
    %v1045 = vmul.f32 %v1032, %v1028
    %v1046 = vmul.f32 %v1036, %v1027
    %v1047 = vmul.f32 %v1040, %v1026
    %v1048 = vmul.f32 %v1044, %v1025
    %v1049 = vadd.f32 %v1013, %v1045
    %v1050 = vadd.f32 %v1014, %v1046
    %v1051 = vadd.f32 %v1015, %v1047
    %v1052 = vadd.f32 %v1016, %v1048
    %1053 = vrot.lane.b32.xlu0 %v245, 1
    %v1054 = vpop.permute.xlu0 %1053
    %1055 = vrot.lane.b32.xlu0 %v246, 1
    %v1056 = vpop.permute.xlu0 %1055
    %1057 = vrot.lane.b32.xlu0 %v247, 1
    %v1058 = vpop.permute.xlu0 %1057
    %1059 = vrot.lane.b32.xlu0 %v248, 1
    %v1060 = vpop.permute.xlu0 %1059
    %v1061 = vsel %vm573, %v1058, %v1060
    %v1062 = vsel %vm573, %v1056, %v1058
    %v1063 = vsel %vm573, %v1054, %v1056
    %v1064 = vsel %vm573, %v1060, %v1054
    %v1065 = vlaneseq
    %v1066 = vshrl.u32 %v1065, 7
    %v1067 = vsub.s32 3, %v1066
    %v1068 = vrot.slane %v937, %v1067
    %v1069 = vlaneseq
    %v1070 = vshrl.u32 %v1069, 7
    %v1071 = vsub.s32 3, %v1070
    %v1072 = vrot.slane %v938, %v1071
    %v1073 = vlaneseq
    %v1074 = vshrl.u32 %v1073, 7
    %v1075 = vsub.s32 3, %v1074
    %v1076 = vrot.slane %v939, %v1075
    %v1077 = vlaneseq
    %v1078 = vshrl.u32 %v1077, 7
    %v1079 = vsub.s32 3, %v1078
    %v1080 = vrot.slane %v940, %v1079
    %v1081 = vmul.f32 %v1068, %v1064
    %v1082 = vmul.f32 %v1072, %v1063
    %v1083 = vmul.f32 %v1076, %v1062
    %v1084 = vmul.f32 %v1080, %v1061
    %v1085 = vadd.f32 %v1049, %v1081
    %v1086 = vadd.f32 %v1050, %v1082
    %v1087 = vadd.f32 %v1051, %v1083
    %v1088 = vadd.f32 %v1052, %v1084
    %v1089 = vlaneseq
    %v1090 = vshrl.u32 %v1089, 7
    %v1091 = vsub.s32 4, %v1090
    %v1092 = vrot.slane %v937, %v1091
    %v1093 = vlaneseq
    %v1094 = vshrl.u32 %v1093, 7
    %v1095 = vsub.s32 4, %v1094
    %v1096 = vrot.slane %v938, %v1095
    %v1097 = vlaneseq
    %v1098 = vshrl.u32 %v1097, 7
    %v1099 = vsub.s32 4, %v1098
    %v1100 = vrot.slane %v939, %v1099
    %v1101 = vlaneseq
    %v1102 = vshrl.u32 %v1101, 7
    %v1103 = vsub.s32 4, %v1102
    %v1104 = vrot.slane %v940, %v1103
    %v1105 = vmul.f32 %v1092, %v245
    %v1106 = vmul.f32 %v1096, %v246
    %v1107 = vmul.f32 %v1100, %v247
    %v1108 = vmul.f32 %v1104, %v248
    %v1109 = vadd.f32 %v1085, %v1105
    %v1110 = vadd.f32 %v1086, %v1106
    %v1111 = vadd.f32 %v1087, %v1107
    %v1112 = vadd.f32 %v1088, %v1108
    %1113 = vrot.lane.b32.xlu0 %v245, 127
    %v1114 = vpop.permute.xlu0 %1113
    %1115 = vrot.lane.b32.xlu0 %v246, 127
    %v1116 = vpop.permute.xlu0 %1115
    %1117 = vrot.lane.b32.xlu0 %v247, 127
    %v1118 = vpop.permute.xlu0 %1117
    %1119 = vrot.lane.b32.xlu0 %v248, 127
    %v1120 = vpop.permute.xlu0 %1119
    %v1121 = vsel %vm642, %v1118, %v1120
    %v1122 = vsel %vm642, %v1116, %v1118
    %v1123 = vsel %vm642, %v1114, %v1116
    %v1124 = vsel %vm642, %v1120, %v1114
    %v1125 = vlaneseq
    %v1126 = vshrl.u32 %v1125, 7
    %v1127 = vsub.s32 5, %v1126
    %v1128 = vrot.slane %v937, %v1127
    %v1129 = vlaneseq
    %v1130 = vshrl.u32 %v1129, 7
    %v1131 = vsub.s32 5, %v1130
    %v1132 = vrot.slane %v938, %v1131
    %v1133 = vlaneseq
    %v1134 = vshrl.u32 %v1133, 7
    %v1135 = vsub.s32 5, %v1134
    %v1136 = vrot.slane %v939, %v1135
    %v1137 = vlaneseq
    %v1138 = vshrl.u32 %v1137, 7
    %v1139 = vsub.s32 5, %v1138
    %v1140 = vrot.slane %v940, %v1139
    %v1141 = vmul.f32 %v1128, %v1123
    %v1142 = vmul.f32 %v1132, %v1122
    %v1143 = vmul.f32 %v1136, %v1121
    %v1144 = vmul.f32 %v1140, %v1124
    %v1145 = vadd.f32 %v1109, %v1141
    %v1146 = vadd.f32 %v1110, %v1142
    %v1147 = vadd.f32 %v1111, %v1143
    %v1148 = vadd.f32 %v1112, %v1144
    %1149 = vrot.lane.b32.xlu0 %v245, 113
    %v1150 = vpop.permute.xlu0 %1149
    %1151 = vrot.lane.b32.xlu0 %v246, 113
    %v1152 = vpop.permute.xlu0 %1151
    %1153 = vrot.lane.b32.xlu0 %v247, 113
    %v1154 = vpop.permute.xlu0 %1153
    %1155 = vrot.lane.b32.xlu0 %v248, 113
    %v1156 = vpop.permute.xlu0 %1155
    %v1157 = vsel %vm683, %v1154, %v1156
    %v1158 = vsel %vm683, %v1152, %v1154
    %v1159 = vsel %vm683, %v1150, %v1152
    %v1160 = vsel %vm683, %v1156, %v1150
    %v1161 = vlaneseq
    %v1162 = vshrl.u32 %v1161, 7
    %v1163 = vsub.s32 6, %v1162
    %v1164 = vrot.slane %v937, %v1163
    %v1165 = vlaneseq
    %v1166 = vshrl.u32 %v1165, 7
    %v1167 = vsub.s32 6, %v1166
    %v1168 = vrot.slane %v938, %v1167
    %v1169 = vlaneseq
    %v1170 = vshrl.u32 %v1169, 7
    %v1171 = vsub.s32 6, %v1170
    %v1172 = vrot.slane %v939, %v1171
    %v1173 = vlaneseq
    %v1174 = vshrl.u32 %v1173, 7
    %v1175 = vsub.s32 6, %v1174
    %v1176 = vrot.slane %v940, %v1175
    %v1177 = vmul.f32 %v1164, %v1159
    %v1178 = vmul.f32 %v1168, %v1158
    %v1179 = vmul.f32 %v1172, %v1157
    %v1180 = vmul.f32 %v1176, %v1160
    %v1181 = vadd.f32 %v1145, %v1177
    %v1182 = vadd.f32 %v1146, %v1178
    %v1183 = vadd.f32 %v1147, %v1179
    %v1184 = vadd.f32 %v1148, %v1180
    %1185 = vrot.lane.b32.xlu0 %v245, 112
    %v1186 = vpop.permute.xlu0 %1185
    %1187 = vrot.lane.b32.xlu0 %v246, 112
    %v1188 = vpop.permute.xlu0 %1187
    %1189 = vrot.lane.b32.xlu0 %v247, 112
    %v1190 = vpop.permute.xlu0 %1189
    %1191 = vrot.lane.b32.xlu0 %v248, 112
    %v1192 = vpop.permute.xlu0 %1191
    %v1193 = vsel %vm724, %v1190, %v1192
    %v1194 = vsel %vm724, %v1188, %v1190
    %v1195 = vsel %vm724, %v1186, %v1188
    %v1196 = vsel %vm724, %v1192, %v1186
    %v1197 = vlaneseq
    %v1198 = vshrl.u32 %v1197, 7
    %v1199 = vsub.s32 7, %v1198
    %v1200 = vrot.slane %v937, %v1199
    %v1201 = vlaneseq
    %v1202 = vshrl.u32 %v1201, 7
    %v1203 = vsub.s32 7, %v1202
    %v1204 = vrot.slane %v938, %v1203
    %v1205 = vlaneseq
    %v1206 = vshrl.u32 %v1205, 7
    %v1207 = vsub.s32 7, %v1206
    %v1208 = vrot.slane %v939, %v1207
    %v1209 = vlaneseq
    %v1210 = vshrl.u32 %v1209, 7
    %v1211 = vsub.s32 7, %v1210
    %v1212 = vrot.slane %v940, %v1211
    %v1213 = vmul.f32 %v1200, %v1195
    %v1214 = vmul.f32 %v1204, %v1194
    %v1215 = vmul.f32 %v1208, %v1193
    %v1216 = vmul.f32 %v1212, %v1196
    %v1217 = vadd.f32 %v1181, %v1213
    %v1218 = vadd.f32 %v1182, %v1214
    %v1219 = vadd.f32 %v1183, %v1215
    %v1220 = vadd.f32 %v1184, %v1216
    %1221 = vrot.lane.b32.xlu0 %v245, 111
    %v1222 = vpop.permute.xlu0 %1221
    %1223 = vrot.lane.b32.xlu0 %v246, 111
    %v1224 = vpop.permute.xlu0 %1223
    %1225 = vrot.lane.b32.xlu0 %v247, 111
    %v1226 = vpop.permute.xlu0 %1225
    %1227 = vrot.lane.b32.xlu0 %v248, 111
    %v1228 = vpop.permute.xlu0 %1227
    %v1229 = vsel %vm765, %v1226, %v1228
    %v1230 = vsel %vm765, %v1224, %v1226
    %v1231 = vsel %vm765, %v1222, %v1224
    %v1232 = vsel %vm765, %v1228, %v1222
    %v1233 = vlaneseq
    %v1234 = vshrl.u32 %v1233, 7
    %v1235 = vsub.s32 0, %v1234
    %v1236 = vrot.slane %v941, %v1235
    %v1237 = vlaneseq
    %v1238 = vshrl.u32 %v1237, 7
    %v1239 = vsub.s32 0, %v1238
    %v1240 = vrot.slane %v942, %v1239
    %v1241 = vlaneseq
    %v1242 = vshrl.u32 %v1241, 7
    %v1243 = vsub.s32 0, %v1242
    %v1244 = vrot.slane %v943, %v1243
    %v1245 = vlaneseq
    %v1246 = vshrl.u32 %v1245, 7
    %v1247 = vsub.s32 0, %v1246
    %v1248 = vrot.slane %v944, %v1247
    %v1249 = vmul.f32 %v1236, %v1231
    %v1250 = vmul.f32 %v1240, %v1230
    %v1251 = vmul.f32 %v1244, %v1229
    %v1252 = vmul.f32 %v1248, %v1232
    %v1253 = vadd.f32 %v1217, %v1249
    %v1254 = vadd.f32 %v1218, %v1250
    %v1255 = vadd.f32 %v1219, %v1251
    %v1256 = vadd.f32 %v1220, %v1252
    %v1257 = vmul.f32 %v1253, %v930
    %v1258 = vmul.f32 %v1254, %v932
    %v1259 = vmul.f32 %v1255, %v934
    %v1260 = vmul.f32 %v1256, %v936
    %1261 = vst [vmem:[#allocation5] sm:$0xff] %v1257
    %1262 = vst [vmem:[#allocation5 + $0x8] sm:$0xff] %v1258
    %1263 = vst [vmem:[#allocation5 + $0x10] sm:$0xff] %v1259
    %1264 = vst [vmem:[#allocation5 + $0x18] sm:$0xff] %v1260
    // Predicated region
    $region30: #{tpu_custom_call.1} parent=1 // pred_check
      _
    $region31: #{tpu_custom_call.1} parent=1 // pred_check_branch
      %1266 = sbr.rel (0) target = $region33
    $region32: #{tpu_custom_call.1} parent=1 // pred_region
      %s1268 = ssub.s32 512, 512
      %1269 = vsyncadd [#allocation4], %s1268
      %s1271 = sshll.u32 [#allocation5], 4
      %s1272 = int_to_ptr.vmem [resolvable:$true] %s1271
      %1274 = dma.vmem_to_hbm [thread:$0]  %s1272, 512, %s6, [#allocation4]
    $region33: #{tpu_custom_call.1} parent=1 // pred_fallthru
      _
    // Predicated region
    $region34: #{tpu_custom_call.1} parent=1 // pred_check
      _
    $region35: #{tpu_custom_call.1} parent=1 // pred_check_branch
      %1276 = sbr.rel (0) target = $region37
    $region36: #{tpu_custom_call.1} parent=1 // pred_region
      %1277 = dma.done [#allocation4], 512
    $region37: #{tpu_custom_call.1} parent=1 // pred_fallthru
      _
    %1278 = vsyncpa [#allocation3], 1
    %1279 = vsyncpa [#allocation4], 1

</llo_original>
